<compile_context>
chip_gen: v7x
topology: tpu7x:2x2x1
jax: 0.10.0
libtpu: 0.0.40
codegen_flags: <defaults>
</compile_context>

<pallas_src>
import math
from functools import partial

import jax
import jax.numpy as jnp
from jax.experimental import pallas as pl
from jax.experimental.pallas import tpu as pltpu


# --------------------------------------------------------------------------
# Fused kernel: input_proj -> expmap0 -> fused QKV LorentzLinear ->
#               head-stacked Lorentz attention -> logmap0 -> output_proj
# --------------------------------------------------------------------------
def _fused_kernel(scal_ref, x_ref, ipg_ref, ipb_ref, ipw_ref, ipbl_ref,
                  qwt_ref, qws_ref, qb_ref, opg_ref, opb_ref, opw_ref, opbl_ref,
                  o_ref, *, num_heads):
    f32 = jnp.float32
    bf16 = jnp.bfloat16
    nb, sl, hid = x_ref.shape
    ld = ipw_ref.shape[1]
    md = ld + 1
    dh = md // num_heads
    rows = nb * sl

    inv_alpha = scal_ref[0]        # 1 / exp(clamp(scale_alpha, max=0))
    ll_exp = scal_ref[1]           # exp(LorentzLinear.scale)
    two_inv_scale = scal_ref[2]    # 2 / attn_scale  (the +2 offset & bias cancel in softmax)

    # ---- input_proj: LayerNorm -> (dropout = identity) -> Linear -> ReLU ----
    # exp(alpha) is pre-folded into ip_w / ip_b on the host (ReLU commutes with
    # positive scaling), so `xs` below is already the scaled input to expmap0.
    x = x_ref[...].reshape(rows, hid).astype(f32)
    mu = jnp.mean(x, axis=-1, keepdims=True)
    var = jnp.mean((x - mu) ** 2, axis=-1, keepdims=True)
    xn = (x - mu) * jax.lax.rsqrt(var + 1e-5) * ipg_ref[...] + ipb_ref[...]
    h = jnp.dot(xn.astype(bf16), ipw_ref[...], preferred_element_type=f32) + ipbl_ref[...]
    xs = jnp.maximum(h, 0.0)                                   # (rows, ld)

    # ---- pad time=0, Lorentz expmap0 (curvature k = 1) ----
    nrm = jnp.sqrt(jnp.sum(xs * xs, axis=-1, keepdims=True))
    e, ei = jnp.exp(nrm), jnp.exp(-nrm)
    time0 = 0.5 * (e + ei)                                     # cosh(||x||)
    sinhc = jnp.where(nrm < 1e-6, 1.0,
                      0.5 * (e - ei) / jnp.maximum(nrm, 1e-30))  # sinh(x)/x -> 1 at 0
    space0 = sinhc * xs                                        # (rows, ld)
    # hyperboloid point xl = [time0 | space0] is NOT materialized:
    #   xl @ W == time0 * W[0:1, :] + space0 @ W[1:, :]

    # ---- fused q/k/v LorentzLinear: one matmul for all three projections ----
    yqkv = (jnp.dot(space0.astype(bf16), qws_ref[...], preferred_element_type=f32)
            + time0 * qwt_ref[...] + qb_ref[...])              # (rows, 3*md)

    lane = jax.lax.broadcasted_iota(jnp.int32, (1, md), 1)
    is_time = lane == 0

    def lorentz_reparam(y):                                    # (rows, md) -> (rows, md)
        t_raw = jnp.sum(jnp.where(is_time, y, 0.0), axis=-1, keepdims=True)
        tim = 1.0 / (1.0 + jnp.exp(-t_raw)) * ll_exp + 1.1
        sq = jnp.sum(jnp.where(is_time, 0.0, y * y), axis=-1, keepdims=True)
        scl = jnp.sqrt((tim * tim - 1.0) / jnp.maximum(sq, 1e-8))
        return jnp.where(is_time, tim, y * scl)

    q = lorentz_reparam(yqkv[:, 0 * md:1 * md]).reshape(nb, sl, md)
    k = lorentz_reparam(yqkv[:, 1 * md:2 * md]).reshape(nb, sl, md)
    v = lorentz_reparam(yqkv[:, 2 * md:3 * md]).reshape(nb, sl, md)

    # ---- head-stacked Lorentz attention ----
    # Per-head masked queries are stacked along the seq axis so there is ONE QK^T
    # einsum and ONE PV einsum per grid step; the per-head lane mask is applied to
    # `ave` afterwards (masking the uncontracted lane axis commutes through the
    # key contraction).
    lane3 = jax.lax.broadcasted_iota(jnp.int32, (1, 1, md), 2)
    is_head_time = lane3 == 0
    for hd in range(1, num_heads):
        is_head_time = jnp.logical_or(is_head_time, lane3 == hd * dh)
    sign = jnp.where(is_head_time, -1.0, 1.0).astype(f32)      # per-head time coord negated

    head_masks = [((lane3 >= hd * dh) & (lane3 < (hd + 1) * dh)).astype(f32)
                  for hd in range(num_heads)]
    head_mask = jnp.concatenate(
        [jnp.broadcast_to(m, (1, sl, md)) for m in head_masks], axis=1)  # (1, heads*sl, md)

    qs = q * sign
    q_stack = jnp.concatenate([qs] * num_heads, axis=1) * head_mask      # (nb, heads*sl, md)

    # QK^T kept in f32 (it feeds exp(); logit precision). PV + projections use bf16 MXU.
    s = jnp.einsum("bqd,bkd->bqk", q_stack, k,
                   preferred_element_type=f32)                 # (nb, heads*sl, sl)
    # Softmax numerator only: the Lorentz mid-point normalization below is exactly
    # scale-invariant per query row, so the denominator is dropped; the
    # (2 + 2*s)/scale + bias affine reduces to s * (2/scale) after max subtraction.
    # TODO(synk): attention_mask and attention dropout not implemented (mask=None, eval).
    p = jnp.exp((s - jnp.max(s, axis=-1, keepdims=True)) * two_inv_scale)

    ave = jnp.einsum("bqk,bkd->bqd", p.astype(bf16), v.astype(bf16),
                     preferred_element_type=f32) * head_mask   # (nb, heads*sl, md)
    linner = jnp.sum(ave * ave * sign, axis=-1, keepdims=True)
    ctx_stack = ave * jax.lax.rsqrt(jnp.maximum(jnp.abs(linner), 1e-8))
    ctx = ctx_stack[:, 0:sl, :]
    for hd in range(1, num_heads):
        ctx = ctx + ctx_stack[:, hd * sl:(hd + 1) * sl, :]     # disjoint head lanes
    ctx = ctx.reshape(rows, md)

    # ---- logmap0, drop (neutralize) the time lane, divide by exp(alpha) ----
    t = jnp.sum(jnp.where(is_time, ctx, 0.0), axis=-1, keepdims=True)
    t = jnp.maximum(t, 1.0 + 1e-7)
    sqt = jnp.sqrt(t * t - 1.0)
    y = ctx * (jnp.log(t + sqt) / jnp.maximum(sqt, 1e-7) * inv_alpha)    # (rows, md)

    # ---- output_proj: LayerNorm over the ld space lanes -> Linear -> ReLU ----
    # (time lane is a no-op: gamma/beta padded with 0, op_w has a zero time row)
    m = jnp.sum(jnp.where(is_time, 0.0, y), axis=-1, keepdims=True) / ld
    d = jnp.where(is_time, 0.0, y - m)
    varo = jnp.sum(d * d, axis=-1, keepdims=True) / ld
    yn = d * jax.lax.rsqrt(varo + 1e-5) * opg_ref[...] + opb_ref[...]
    out = jnp.dot(yn.astype(bf16), opw_ref[...], preferred_element_type=f32) + opbl_ref[...]
    out = jnp.maximum(out, 0.0)                                # (rows, hid)
    o_ref[...] = out.reshape(nb, sl, hid).astype(o_ref.dtype)


# --------------------------------------------------------------------------
# Block-size selection (rows/step, >=2 grid steps, VMEM budget)
# --------------------------------------------------------------------------
def _block_vmem_bytes(bn, seq_len, hidden, ld, md, heads):
    """Rough f32 working-set estimate for one grid step."""
    rows = bn * seq_len
    io = 4 * rows * hidden * 4                        # in + out blocks, double-buffered
    inter = rows * (2 * hidden + ld + 12 * md) * 4    # fused elementwise intermediates
    attn = 3 * heads * bn * seq_len * seq_len * 4     # stacked scores + probs (+ slack)
    return io + inter + attn


def _pick_block_n(n, seq_len, hidden, ld, md, heads, *,
                  target_rows=2048, vmem_budget_bytes=24 << 20):
    """Pick rows/step large enough to amortize the ~0.35us per-step overhead, capped so
    (a) the grid has >= 2 steps (both v7x TensorCores get work) and (b) the per-block
    working set stays under a conservative VMEM budget (v7x: 64 MiB physical,
    v5e: 16 MiB scoped default — we also raise vmem_limit_bytes explicitly)."""
    bn = max(1, target_rows // max(seq_len, 1))
    if n > 1:
        bn = min(bn, (n + 1) // 2)          # guarantee at least two grid steps
    bn = max(1, min(bn, n))
    while bn > 1 and _block_vmem_bytes(bn, seq_len, hidden, ld, md, heads) > vmem_budget_bytes:
        bn = max(1, bn // 2)
    return bn


# --------------------------------------------------------------------------
# Wrapper
# --------------------------------------------------------------------------
def lorentz_self_attention(x, p, attention_mask=None, *, num_heads, block_n=None):
    assert attention_mask is None  # TODO(synk): attention_mask semantics not reproduced.
    N, L, H = x.shape
    ld = p["ip_w"].shape[1]
    md = ld + 1
    assert md % num_heads == 0

    alpha_exp = jnp.exp(jnp.minimum(p["scale_alpha"], 0.0))      # clamp(max=0).exp()
    scalars = jnp.stack([
        1.0 / alpha_exp,
        jnp.exp(p["ll_scale"]),
        2.0 / p["attn_scale"],       # +2 offset & attn_bias cancel after max-subtraction
    ]).astype(jnp.float32)

    # exp(alpha) folded into input-proj weights/bias (ReLU commutes with positive scale);
    # MXU weight operands pre-cast to bf16 (f32 accumulation in-kernel).
    ip_w = (p["ip_w"] * alpha_exp).astype(jnp.bfloat16)
    ip_b = (p["ip_b"] * alpha_exp).reshape(1, ld).astype(jnp.float32)

    # Fused q/k/v weight; split into the hyperboloid time row (elementwise use, f32)
    # and space rows (MXU, bf16) so the [time | space] concat is never materialized.
    qkv_w = jnp.concatenate([p["q_w"], p["k_w"], p["v_w"]], axis=1)      # (md, 3*md)
    qkv_b = jnp.concatenate([p["q_b"], p["k_b"], p["v_b"]], axis=0)      # (3*md,)
    qkv_wt = qkv_w[:1, :].astype(jnp.float32)
    qkv_ws = qkv_w[1:, :].astype(jnp.bfloat16)

    # Output-proj params padded so the dead time lane is a no-op inside the kernel.
    z1 = jnp.zeros((1,), jnp.float32)
    op_g_pad = jnp.concatenate([z1, p["op_ln_g"]]).reshape(1, md)
    op_b_pad = jnp.concatenate([z1, p["op_ln_b"]]).reshape(1, md)
    op_w_pad = jnp.concatenate(
        [jnp.zeros((1, H), p["op_w"].dtype), p["op_w"]], axis=0).astype(jnp.bfloat16)

    if block_n is None:
        block_n = _pick_block_n(N, L, H, ld, md, num_heads)
    grid_n = pl.cdiv(N, block_n)
    n_pad = grid_n * block_n
    x_in = x if n_pad == N else jnp.pad(x, ((0, n_pad - N), (0, 0), (0, 0)))

    zmap2 = lambda i: (0, 0)
    out = pl.pallas_call(
        partial(_fused_kernel, num_heads=num_heads),
        out_shape=jax.ShapeDtypeStruct((n_pad, L, H), x.dtype),
        grid=(grid_n,),
        in_specs=[
            pl.BlockSpec(memory_space=pltpu.MemorySpace.SMEM),       # scalars
            pl.BlockSpec((block_n, L, H), lambda i: (i, 0, 0)),      # x
            pl.BlockSpec((1, H), zmap2),                             # input LN gamma
            pl.BlockSpec((1, H), zmap2),                             # input LN beta
            pl.BlockSpec((H, ld), zmap2),                            # input proj weight (bf16, pre-scaled)
            pl.BlockSpec((1, ld), zmap2),                            # input proj bias (pre-scaled)
            pl.BlockSpec((1, 3 * md), zmap2),                        # fused qkv weight (time row)
            pl.BlockSpec((ld, 3 * md), zmap2),                       # fused qkv weight (space rows, bf16)
            pl.BlockSpec((1, 3 * md), zmap2),                        # fused qkv bias
            pl.BlockSpec((1, md), zmap2),                            # output LN gamma (padded)
            pl.BlockSpec((1, md), zmap2),                            # output LN beta (padded)
            pl.BlockSpec((md, H), zmap2),                            # output proj weight (zero row 0, bf16)
            pl.BlockSpec((1, H), zmap2),                             # output proj bias
        ],
        out_specs=pl.BlockSpec((block_n, L, H), lambda i: (i, 0, 0)),
        compiler_params=pltpu.CompilerParams(
            dimension_semantics=("parallel",),
            vmem_limit_bytes=48 * 1024 * 1024),
    )(scalars, x_in,
      p["ip_ln_g"].reshape(1, H), p["ip_ln_b"].reshape(1, H),
      ip_w, ip_b,
      qkv_wt, qkv_ws, qkv_b.reshape(1, 3 * md),
      op_g_pad, op_b_pad, op_w_pad, p["op_b"].reshape(1, H))
    return out if n_pad == N else out[:N]


# --------------------------------------------------------------------------
# Parameters (deterministic synthetic init) + pure-JAX reference
# --------------------------------------------------------------------------
def init_params(key, hidden, lorentz_dim, num_heads):
    md = lorentz_dim + 1
    ks = jax.random.split(key, 5)

    def w(k, shape):
        return (0.02 * jax.random.normal(k, shape)).astype(jnp.float32)

    return {
        "ip_ln_g": jnp.ones((hidden,), jnp.float32),
        "ip_ln_b": jnp.zeros((hidden,), jnp.float32),
        "ip_w": w(ks[0], (hidden, lorentz_dim)),
        "ip_b": jnp.zeros((lorentz_dim,), jnp.float32),
        "scale_alpha": jnp.float32(math.log(lorentz_dim ** (-0.5))),
        "q_w": w(ks[1], (md, md)), "q_b": jnp.zeros((md,), jnp.float32),
        "k_w": w(ks[2], (md, md)), "k_b": jnp.zeros((md,), jnp.float32),
        "v_w": w(ks[3], (md, md)), "v_b": jnp.zeros((md,), jnp.float32),
        "ll_scale": jnp.float32(math.log(10.0)),            # LorentzLinear scale param
        "attn_scale": jnp.float32(math.sqrt(md // num_heads)),
        "attn_bias": jnp.float32(0.0),                       # cancels in softmax
        "op_ln_g": jnp.ones((lorentz_dim,), jnp.float32),
        "op_ln_b": jnp.zeros((lorentz_dim,), jnp.float32),
        "op_w": w(ks[4], (lorentz_dim, hidden)),
        "op_b": jnp.zeros((hidden,), jnp.float32),
    }


def lorentz_self_attention_reference(x, p, *, num_heads):
    """Pure-JAX (non-Pallas) mirror of the PyTorch forward, used for validation."""
    N, L, H = x.shape
    ld = p["ip_w"].shape[1]
    md = ld + 1
    dh = md // num_heads

    def layer_norm(z, g, b):
        mu = jnp.mean(z, axis=-1, keepdims=True)
        var = jnp.mean((z - mu) ** 2, axis=-1, keepdims=True)
        return (z - mu) * jax.lax.rsqrt(var + 1e-5) * g + b

    h = jnp.maximum(layer_norm(x, p["ip_ln_g"], p["ip_ln_b"]) @ p["ip_w"] + p["ip_b"], 0.0)
    alpha = jnp.exp(jnp.minimum(p["scale_alpha"], 0.0))
    u = h * alpha
    nrm = jnp.sqrt(jnp.sum(u * u, axis=-1, keepdims=True))
    time = jnp.cosh(nrm)
    space = jnp.where(nrm < 1e-6, 1.0, jnp.sinh(nrm) / jnp.maximum(nrm, 1e-30)) * u
    xl = jnp.concatenate([time, space], axis=-1)

    ll = jnp.exp(p["ll_scale"])

    def lor_lin(z, w, b):
        y = z @ w + b
        t = jax.nn.sigmoid(y[..., :1]) * ll + 1.1
        sq = jnp.maximum(jnp.sum(y[..., 1:] ** 2, axis=-1, keepdims=True), 1e-8)
        return jnp.concatenate([t, y[..., 1:] * jnp.sqrt((t * t - 1.0) / sq)], axis=-1)

    def heads(t):
        return t.reshape(N, L, num_heads, dh).transpose(0, 2, 1, 3)

    q, k, v = (heads(lor_lin(xl, p[f"{n}_w"], p[f"{n}_b"])) for n in ("q", "k", "v"))
    sign = jnp.concatenate([-jnp.ones((1,), jnp.float32), jnp.ones((dh - 1,), jnp.float32)])
    qk = jnp.einsum("nhqd,nhkd->nhqk", q * sign, k)
    attn = jax.nn.softmax((2.0 + 2.0 * qk) / p["attn_scale"] + p["attn_bias"], axis=-1)
    ave = jnp.einsum("nhqk,nhkd->nhqd", attn, v)
    linner = jnp.sum(ave * ave * sign, axis=-1, keepdims=True)
    ctx = ave / jnp.sqrt(jnp.maximum(jnp.abs(linner), 1e-8))
    ctx = ctx.transpose(0, 2, 1, 3).reshape(N, L, md)

    t = jnp.maximum(ctx[..., :1], 1.0 + 1e-7)
    sq = jnp.sqrt(t * t - 1.0)
    y = jnp.log(t + sq) * ctx[..., 1:] / jnp.maximum(sq, 1e-7)
    y = y / alpha
    return jnp.maximum(layer_norm(y, p["op_ln_g"], p["op_ln_b"]) @ p["op_w"] + p["op_b"], 0.0)


if __name__ == "__main__":
    N, L = 2, 8
    hidden_size, lorentz_dim, num_heads = 32, 15, 4   # model_dim = 16, dim_per_head = 4

    key = jax.random.PRNGKey(0)
    kx, kp = jax.random.split(key)
    x = jax.random.normal(kx, (N, L, hidden_size), dtype=jnp.float32)
    params = init_params(kp, hidden_size, lorentz_dim, num_heads)

    out = lorentz_self_attention(x, params, attention_mask=None, num_heads=num_heads)
    out = jax.block_until_ready(out)

    assert out.shape == (N, L, hidden_size), out.shape
    assert bool(jnp.all(jnp.isfinite(out)))

    ref = lorentz_self_attention_reference(x, params, num_heads=num_heads)
    err = float(jnp.max(jnp.abs(out - ref)))
    assert err < 1e-2, f"mismatch vs reference: max abs err = {err}"

    # Exercise the batch-padding / multi-step-grid path (N not divisible by block_n).
    x3 = jax.random.normal(jax.random.PRNGKey(1), (3, L, hidden_size), dtype=jnp.float32)
    out3 = jax.block_until_ready(
        lorentz_self_attention(x3, params, attention_mask=None, num_heads=num_heads))
    ref3 = lorentz_self_attention_reference(x3, params, num_heads=num_heads)
    assert out3.shape == (3, L, hidden_size), out3.shape
    err3 = float(jnp.max(jnp.abs(out3 - ref3)))
    assert err3 < 1e-2, f"padded-batch mismatch vs reference: max abs err = {err3}"

    print("KERNEL_OK")
</pallas_src>

<mosaic_0001>
module attributes {stable_mosaic.version = 11 : i64} {
  func.func @_fused_kernel(%arg0: i32, %arg1: memref<3xf32, #tpu.memory_space<smem>>, %arg2: memref<1x8x32xf32, #tpu.memory_space<vmem>>, %arg3: memref<1x32xf32, #tpu.memory_space<vmem>>, %arg4: memref<1x32xf32, #tpu.memory_space<vmem>>, %arg5: memref<32x15xbf16, #tpu.memory_space<vmem>>, %arg6: memref<1x15xf32, #tpu.memory_space<vmem>>, %arg7: memref<1x48xf32, #tpu.memory_space<vmem>>, %arg8: memref<15x48xbf16, #tpu.memory_space<vmem>>, %arg9: memref<1x48xf32, #tpu.memory_space<vmem>>, %arg10: memref<1x16xf32, #tpu.memory_space<vmem>>, %arg11: memref<1x16xf32, #tpu.memory_space<vmem>>, %arg12: memref<16x32xbf16, #tpu.memory_space<vmem>>, %arg13: memref<1x32xf32, #tpu.memory_space<vmem>>, %arg14: memref<1x8x32xf32, #tpu.memory_space<vmem>>) attributes {dimension_semantics = [#tpu.dimension_semantics<parallel>], iteration_bounds = array<i64: 2>, scalar_prefetch = 0 : i64, scratch_operands = 0 : i64, tpu.core_type = #tpu.core_type<tc>, window_params = [{transform_indices = @transform_0, window_bounds = array<i64: 3>}, {transform_indices = @transform_1, window_bounds = array<i64: 1, 8, 32>}, {pipeline_mode = #tpu.pipeline_mode<synchronous>, transform_indices = @transform_2, window_bounds = array<i64: 1, 32>}, {pipeline_mode = #tpu.pipeline_mode<synchronous>, transform_indices = @transform_3, window_bounds = array<i64: 1, 32>}, {pipeline_mode = #tpu.pipeline_mode<synchronous>, transform_indices = @transform_4, window_bounds = array<i64: 32, 15>}, {pipeline_mode = #tpu.pipeline_mode<synchronous>, transform_indices = @transform_5, window_bounds = array<i64: 1, 15>}, {pipeline_mode = #tpu.pipeline_mode<synchronous>, transform_indices = @transform_6, window_bounds = array<i64: 1, 48>}, {pipeline_mode = #tpu.pipeline_mode<synchronous>, transform_indices = @transform_7, window_bounds = array<i64: 15, 48>}, {pipeline_mode = #tpu.pipeline_mode<synchronous>, transform_indices = @transform_8, window_bounds = array<i64: 1, 48>}, {pipeline_mode = #tpu.pipeline_mode<synchronous>, transform_indices = @transform_9, window_bounds = array<i64: 1, 16>}, {pipeline_mode = #tpu.pipeline_mode<synchronous>, transform_indices = @transform_10, window_bounds = array<i64: 1, 16>}, {pipeline_mode = #tpu.pipeline_mode<synchronous>, transform_indices = @transform_11, window_bounds = array<i64: 16, 32>}, {pipeline_mode = #tpu.pipeline_mode<synchronous>, transform_indices = @transform_12, window_bounds = array<i64: 1, 32>}, {transform_indices = @transform_13, window_bounds = array<i64: 1, 8, 32>}]} {
    %c0 = arith.constant 0 : index
    %0 = memref.load %arg1[%c0] : memref<3xf32, #tpu.memory_space<smem>>
    %c1 = arith.constant 1 : index
    %1 = memref.load %arg1[%c1] : memref<3xf32, #tpu.memory_space<smem>>
    %c2 = arith.constant 2 : index
    %2 = memref.load %arg1[%c2] : memref<3xf32, #tpu.memory_space<smem>>
    %c0_0 = arith.constant 0 : index
    %c0_1 = arith.constant 0 : index
    %c0_2 = arith.constant 0 : index
    %3 = vector.load %arg2[%c0_0, %c0_1, %c0_2] : memref<1x8x32xf32, #tpu.memory_space<vmem>>, vector<1x8x32xf32>
    %4 = vector.shape_cast %3 : vector<1x8x32xf32> to vector<8x32xf32>
    %cst = arith.constant dense<0.000000e+00> : vector<8xf32>
    %5 = vector.multi_reduction <add>, %4, %cst [1] : vector<8x32xf32> to vector<8xf32>
    %6 = vector.shape_cast %5 : vector<8xf32> to vector<8x1xf32>
    %cst_3 = arith.constant 3.200000e+01 : f32
    %7 = vector.broadcast %cst_3 : f32 to vector<8x1xf32>
    %8 = arith.divf %6, %7 : vector<8x1xf32>
    %9 = vector.broadcast %8 : vector<8x1xf32> to vector<8x32xf32>
    %10 = arith.subf %4, %9 : vector<8x32xf32>
    %11 = arith.mulf %10, %10 : vector<8x32xf32>
    %cst_4 = arith.constant dense<0.000000e+00> : vector<8xf32>
    %12 = vector.multi_reduction <add>, %11, %cst_4 [1] : vector<8x32xf32> to vector<8xf32>
    %13 = vector.shape_cast %12 : vector<8xf32> to vector<8x1xf32>
    %cst_5 = arith.constant 3.200000e+01 : f32
    %14 = vector.broadcast %cst_5 : f32 to vector<8x1xf32>
    %15 = arith.divf %13, %14 : vector<8x1xf32>
    %16 = vector.broadcast %8 : vector<8x1xf32> to vector<8x32xf32>
    %17 = arith.subf %4, %16 : vector<8x32xf32>
    %cst_6 = arith.constant 9.99999974E-6 : f32
    %18 = vector.broadcast %cst_6 : f32 to vector<8x1xf32>
    %19 = arith.addf %15, %18 : vector<8x1xf32>
    %20 = math.rsqrt %19 : vector<8x1xf32>
    %21 = vector.broadcast %20 : vector<8x1xf32> to vector<8x32xf32>
    %22 = arith.mulf %17, %21 : vector<8x32xf32>
    %c0_7 = arith.constant 0 : index
    %c0_8 = arith.constant 0 : index
    %23 = vector.load %arg3[%c0_7, %c0_8] : memref<1x32xf32, #tpu.memory_space<vmem>>, vector<1x32xf32>
    %24 = vector.broadcast %23 : vector<1x32xf32> to vector<8x32xf32>
    %25 = arith.mulf %22, %24 : vector<8x32xf32>
    %c0_9 = arith.constant 0 : index
    %c0_10 = arith.constant 0 : index
    %26 = vector.load %arg4[%c0_9, %c0_10] : memref<1x32xf32, #tpu.memory_space<vmem>>, vector<1x32xf32>
    %27 = vector.broadcast %26 : vector<1x32xf32> to vector<8x32xf32>
    %28 = arith.addf %25, %27 : vector<8x32xf32>
    %29 = arith.truncf %28 : vector<8x32xf32> to vector<8x32xbf16>
    %c0_11 = arith.constant 0 : index
    %c0_12 = arith.constant 0 : index
    %30 = vector.load %arg5[%c0_11, %c0_12] : memref<32x15xbf16, #tpu.memory_space<vmem>>, vector<32x15xbf16>
    %cst_13 = arith.constant dense<0.000000e+00> : vector<8x15xf32>
    %31 = tpu.matmul %29, %30, %cst_13 {dimension_numbers = #tpu.dot_dimension_numbers<[1], [0], [0], [1], [0, 0, 1, 1], [], []>} : vector<8x32xbf16>, vector<32x15xbf16>, vector<8x15xf32> -> vector<8x15xf32>
    %c0_14 = arith.constant 0 : index
    %c0_15 = arith.constant 0 : index
    %32 = vector.load %arg6[%c0_14, %c0_15] : memref<1x15xf32, #tpu.memory_space<vmem>>, vector<1x15xf32>
    %33 = vector.broadcast %32 : vector<1x15xf32> to vector<8x15xf32>
    %34 = arith.addf %31, %33 : vector<8x15xf32>
    %cst_16 = arith.constant 0.000000e+00 : f32
    %35 = vector.broadcast %cst_16 : f32 to vector<8x15xf32>
    %36 = arith.maximumf %34, %35 : vector<8x15xf32>
    %37 = arith.mulf %36, %36 : vector<8x15xf32>
    %cst_17 = arith.constant dense<0.000000e+00> : vector<8xf32>
    %38 = vector.multi_reduction <add>, %37, %cst_17 [1] : vector<8x15xf32> to vector<8xf32>
    %39 = vector.shape_cast %38 : vector<8xf32> to vector<8x1xf32>
    %40 = math.sqrt %39 : vector<8x1xf32>
    %41 = math.exp %40 : vector<8x1xf32>
    %cst_18 = arith.constant 0.000000e+00 : f32
    %42 = vector.broadcast %cst_18 : f32 to vector<8x1xf32>
    %43 = arith.subf %42, %40 : vector<8x1xf32>
    %44 = math.exp %43 : vector<8x1xf32>
    %45 = arith.addf %41, %44 : vector<8x1xf32>
    %cst_19 = arith.constant 5.000000e-01 : f32
    %46 = vector.broadcast %cst_19 : f32 to vector<8x1xf32>
    %47 = arith.mulf %46, %45 : vector<8x1xf32>
    %cst_20 = arith.constant 9.99999997E-7 : f32
    %48 = vector.broadcast %cst_20 : f32 to vector<8x1xf32>
    %49 = arith.cmpf olt, %40, %48 : vector<8x1xf32>
    %50 = arith.subf %41, %44 : vector<8x1xf32>
    %cst_21 = arith.constant 5.000000e-01 : f32
    %51 = vector.broadcast %cst_21 : f32 to vector<8x1xf32>
    %52 = arith.mulf %51, %50 : vector<8x1xf32>
    %cst_22 = arith.constant 1.000000e-30 : f32
    %53 = vector.broadcast %cst_22 : f32 to vector<8x1xf32>
    %54 = arith.maximumf %40, %53 : vector<8x1xf32>
    %55 = arith.divf %52, %54 : vector<8x1xf32>
    %cst_23 = arith.constant 1.000000e+00 : f32
    %56 = vector.broadcast %cst_23 : f32 to vector<8x1xf32>
    %57 = arith.select %49, %56, %55 : vector<8x1xi1>, vector<8x1xf32>
    %58 = vector.broadcast %57 : vector<8x1xf32> to vector<8x15xf32>
    %59 = arith.mulf %58, %36 : vector<8x15xf32>
    %60 = arith.truncf %59 : vector<8x15xf32> to vector<8x15xbf16>
    %c0_24 = arith.constant 0 : index
    %c0_25 = arith.constant 0 : index
    %61 = vector.load %arg8[%c0_24, %c0_25] : memref<15x48xbf16, #tpu.memory_space<vmem>>, vector<15x48xbf16>
    %cst_26 = arith.constant dense<0.000000e+00> : vector<8x48xf32>
    %62 = tpu.matmul %60, %61, %cst_26 {dimension_numbers = #tpu.dot_dimension_numbers<[1], [0], [0], [1], [0, 0, 1, 1], [], []>} : vector<8x15xbf16>, vector<15x48xbf16>, vector<8x48xf32> -> vector<8x48xf32>
    %c0_27 = arith.constant 0 : index
    %c0_28 = arith.constant 0 : index
    %63 = vector.load %arg7[%c0_27, %c0_28] : memref<1x48xf32, #tpu.memory_space<vmem>>, vector<1x48xf32>
    %64 = vector.broadcast %47 : vector<8x1xf32> to vector<8x48xf32>
    %65 = vector.broadcast %63 : vector<1x48xf32> to vector<8x48xf32>
    %66 = arith.mulf %64, %65 : vector<8x48xf32>
    %67 = arith.addf %62, %66 : vector<8x48xf32>
    %c0_29 = arith.constant 0 : index
    %c0_30 = arith.constant 0 : index
    %68 = vector.load %arg9[%c0_29, %c0_30] : memref<1x48xf32, #tpu.memory_space<vmem>>, vector<1x48xf32>
    %69 = vector.broadcast %68 : vector<1x48xf32> to vector<8x48xf32>
    %70 = arith.addf %67, %69 : vector<8x48xf32>
    %71 = tpu.iota {dimensions = array<i32: 1>} : vector<1x16xi32>
    %c0_i32 = arith.constant 0 : i32
    %72 = vector.broadcast %c0_i32 : i32 to vector<1x16xi32>
    %73 = arith.cmpi eq, %71, %72 : vector<1x16xi32>
    %74 = vector.extract_strided_slice %70 {offsets = [0, 0], sizes = [8, 16], strides = [1, 1]} : vector<8x48xf32> to vector<8x16xf32>
    %cst_31 = arith.constant 0.000000e+00 : f32
    %75 = vector.shape_cast %73 : vector<1x16xi1> to vector<1x16xi1>
    %76 = vector.broadcast %75 : vector<1x16xi1> to vector<8x16xi1>
    %77 = vector.broadcast %cst_31 : f32 to vector<8x16xf32>
    %78 = arith.select %76, %74, %77 : vector<8x16xi1>, vector<8x16xf32>
    %cst_32 = arith.constant dense<0.000000e+00> : vector<8xf32>
    %79 = vector.multi_reduction <add>, %78, %cst_32 [1] : vector<8x16xf32> to vector<8xf32>
    %80 = vector.shape_cast %79 : vector<8xf32> to vector<8x1xf32>
    %cst_33 = arith.constant 0.000000e+00 : f32
    %81 = vector.broadcast %cst_33 : f32 to vector<8x1xf32>
    %82 = arith.subf %81, %80 : vector<8x1xf32>
    %83 = math.exp %82 : vector<8x1xf32>
    %cst_34 = arith.constant 1.000000e+00 : f32
    %84 = vector.broadcast %cst_34 : f32 to vector<8x1xf32>
    %85 = arith.addf %84, %83 : vector<8x1xf32>
    %cst_35 = arith.constant 1.000000e+00 : f32
    %86 = vector.broadcast %cst_35 : f32 to vector<8x1xf32>
    %87 = arith.divf %86, %85 : vector<8x1xf32>
    %88 = vector.broadcast %1 : f32 to vector<8x1xf32>
    %89 = arith.mulf %87, %88 : vector<8x1xf32>
    %cst_36 = arith.constant 1.100000e+00 : f32
    %90 = vector.broadcast %cst_36 : f32 to vector<8x1xf32>
    %91 = arith.addf %89, %90 : vector<8x1xf32>
    %92 = arith.mulf %74, %74 : vector<8x16xf32>
    %cst_37 = arith.constant 0.000000e+00 : f32
    %93 = vector.shape_cast %73 : vector<1x16xi1> to vector<1x16xi1>
    %94 = vector.broadcast %93 : vector<1x16xi1> to vector<8x16xi1>
    %95 = vector.broadcast %cst_37 : f32 to vector<8x16xf32>
    %96 = arith.select %94, %95, %92 : vector<8x16xi1>, vector<8x16xf32>
    %cst_38 = arith.constant dense<0.000000e+00> : vector<8xf32>
    %97 = vector.multi_reduction <add>, %96, %cst_38 [1] : vector<8x16xf32> to vector<8xf32>
    %98 = vector.shape_cast %97 : vector<8xf32> to vector<8x1xf32>
    %99 = arith.mulf %91, %91 : vector<8x1xf32>
    %cst_39 = arith.constant 1.000000e+00 : f32
    %100 = vector.broadcast %cst_39 : f32 to vector<8x1xf32>
    %101 = arith.subf %99, %100 : vector<8x1xf32>
    %cst_40 = arith.constant 9.99999993E-9 : f32
    %102 = vector.broadcast %cst_40 : f32 to vector<8x1xf32>
    %103 = arith.maximumf %98, %102 : vector<8x1xf32>
    %104 = arith.divf %101, %103 : vector<8x1xf32>
    %105 = math.sqrt %104 : vector<8x1xf32>
    %106 = vector.broadcast %105 : vector<8x1xf32> to vector<8x16xf32>
    %107 = arith.mulf %74, %106 : vector<8x16xf32>
    %108 = vector.shape_cast %73 : vector<1x16xi1> to vector<1x16xi1>
    %109 = vector.broadcast %108 : vector<1x16xi1> to vector<8x16xi1>
    %110 = vector.shape_cast %91 : vector<8x1xf32> to vector<8x1xf32>
    %111 = vector.broadcast %110 : vector<8x1xf32> to vector<8x16xf32>
    %112 = arith.select %109, %111, %107 : vector<8x16xi1>, vector<8x16xf32>
    %113 = vector.shape_cast %112 : vector<8x16xf32> to vector<1x8x16xf32>
    %114 = vector.extract_strided_slice %70 {offsets = [0, 16], sizes = [8, 16], strides = [1, 1]} : vector<8x48xf32> to vector<8x16xf32>
    %cst_41 = arith.constant 0.000000e+00 : f32
    %115 = vector.shape_cast %73 : vector<1x16xi1> to vector<1x16xi1>
    %116 = vector.broadcast %115 : vector<1x16xi1> to vector<8x16xi1>
    %117 = vector.broadcast %cst_41 : f32 to vector<8x16xf32>
    %118 = arith.select %116, %114, %117 : vector<8x16xi1>, vector<8x16xf32>
    %cst_42 = arith.constant dense<0.000000e+00> : vector<8xf32>
    %119 = vector.multi_reduction <add>, %118, %cst_42 [1] : vector<8x16xf32> to vector<8xf32>
    %120 = vector.shape_cast %119 : vector<8xf32> to vector<8x1xf32>
    %cst_43 = arith.constant 0.000000e+00 : f32
    %121 = vector.broadcast %cst_43 : f32 to vector<8x1xf32>
    %122 = arith.subf %121, %120 : vector<8x1xf32>
    %123 = math.exp %122 : vector<8x1xf32>
    %cst_44 = arith.constant 1.000000e+00 : f32
    %124 = vector.broadcast %cst_44 : f32 to vector<8x1xf32>
    %125 = arith.addf %124, %123 : vector<8x1xf32>
    %cst_45 = arith.constant 1.000000e+00 : f32
    %126 = vector.broadcast %cst_45 : f32 to vector<8x1xf32>
    %127 = arith.divf %126, %125 : vector<8x1xf32>
    %128 = vector.broadcast %1 : f32 to vector<8x1xf32>
    %129 = arith.mulf %127, %128 : vector<8x1xf32>
    %cst_46 = arith.constant 1.100000e+00 : f32
    %130 = vector.broadcast %cst_46 : f32 to vector<8x1xf32>
    %131 = arith.addf %129, %130 : vector<8x1xf32>
    %132 = arith.mulf %114, %114 : vector<8x16xf32>
    %cst_47 = arith.constant 0.000000e+00 : f32
    %133 = vector.shape_cast %73 : vector<1x16xi1> to vector<1x16xi1>
    %134 = vector.broadcast %133 : vector<1x16xi1> to vector<8x16xi1>
    %135 = vector.broadcast %cst_47 : f32 to vector<8x16xf32>
    %136 = arith.select %134, %135, %132 : vector<8x16xi1>, vector<8x16xf32>
    %cst_48 = arith.constant dense<0.000000e+00> : vector<8xf32>
    %137 = vector.multi_reduction <add>, %136, %cst_48 [1] : vector<8x16xf32> to vector<8xf32>
    %138 = vector.shape_cast %137 : vector<8xf32> to vector<8x1xf32>
    %139 = arith.mulf %131, %131 : vector<8x1xf32>
    %cst_49 = arith.constant 1.000000e+00 : f32
    %140 = vector.broadcast %cst_49 : f32 to vector<8x1xf32>
    %141 = arith.subf %139, %140 : vector<8x1xf32>
    %cst_50 = arith.constant 9.99999993E-9 : f32
    %142 = vector.broadcast %cst_50 : f32 to vector<8x1xf32>
    %143 = arith.maximumf %138, %142 : vector<8x1xf32>
    %144 = arith.divf %141, %143 : vector<8x1xf32>
    %145 = math.sqrt %144 : vector<8x1xf32>
    %146 = vector.broadcast %145 : vector<8x1xf32> to vector<8x16xf32>
    %147 = arith.mulf %114, %146 : vector<8x16xf32>
    %148 = vector.shape_cast %73 : vector<1x16xi1> to vector<1x16xi1>
    %149 = vector.broadcast %148 : vector<1x16xi1> to vector<8x16xi1>
    %150 = vector.shape_cast %131 : vector<8x1xf32> to vector<8x1xf32>
    %151 = vector.broadcast %150 : vector<8x1xf32> to vector<8x16xf32>
    %152 = arith.select %149, %151, %147 : vector<8x16xi1>, vector<8x16xf32>
    %153 = vector.shape_cast %152 : vector<8x16xf32> to vector<1x8x16xf32>
    %154 = vector.extract_strided_slice %70 {offsets = [0, 32], sizes = [8, 16], strides = [1, 1]} : vector<8x48xf32> to vector<8x16xf32>
    %cst_51 = arith.constant 0.000000e+00 : f32
    %155 = vector.shape_cast %73 : vector<1x16xi1> to vector<1x16xi1>
    %156 = vector.broadcast %155 : vector<1x16xi1> to vector<8x16xi1>
    %157 = vector.broadcast %cst_51 : f32 to vector<8x16xf32>
    %158 = arith.select %156, %154, %157 : vector<8x16xi1>, vector<8x16xf32>
    %cst_52 = arith.constant dense<0.000000e+00> : vector<8xf32>
    %159 = vector.multi_reduction <add>, %158, %cst_52 [1] : vector<8x16xf32> to vector<8xf32>
    %160 = vector.shape_cast %159 : vector<8xf32> to vector<8x1xf32>
    %cst_53 = arith.constant 0.000000e+00 : f32
    %161 = vector.broadcast %cst_53 : f32 to vector<8x1xf32>
    %162 = arith.subf %161, %160 : vector<8x1xf32>
    %163 = math.exp %162 : vector<8x1xf32>
    %cst_54 = arith.constant 1.000000e+00 : f32
    %164 = vector.broadcast %cst_54 : f32 to vector<8x1xf32>
    %165 = arith.addf %164, %163 : vector<8x1xf32>
    %cst_55 = arith.constant 1.000000e+00 : f32
    %166 = vector.broadcast %cst_55 : f32 to vector<8x1xf32>
    %167 = arith.divf %166, %165 : vector<8x1xf32>
    %168 = vector.broadcast %1 : f32 to vector<8x1xf32>
    %169 = arith.mulf %167, %168 : vector<8x1xf32>
    %cst_56 = arith.constant 1.100000e+00 : f32
    %170 = vector.broadcast %cst_56 : f32 to vector<8x1xf32>
    %171 = arith.addf %169, %170 : vector<8x1xf32>
    %172 = arith.mulf %154, %154 : vector<8x16xf32>
    %cst_57 = arith.constant 0.000000e+00 : f32
    %173 = vector.shape_cast %73 : vector<1x16xi1> to vector<1x16xi1>
    %174 = vector.broadcast %173 : vector<1x16xi1> to vector<8x16xi1>
    %175 = vector.broadcast %cst_57 : f32 to vector<8x16xf32>
    %176 = arith.select %174, %175, %172 : vector<8x16xi1>, vector<8x16xf32>
    %cst_58 = arith.constant dense<0.000000e+00> : vector<8xf32>
    %177 = vector.multi_reduction <add>, %176, %cst_58 [1] : vector<8x16xf32> to vector<8xf32>
    %178 = vector.shape_cast %177 : vector<8xf32> to vector<8x1xf32>
    %179 = arith.mulf %171, %171 : vector<8x1xf32>
    %cst_59 = arith.constant 1.000000e+00 : f32
    %180 = vector.broadcast %cst_59 : f32 to vector<8x1xf32>
    %181 = arith.subf %179, %180 : vector<8x1xf32>
    %cst_60 = arith.constant 9.99999993E-9 : f32
    %182 = vector.broadcast %cst_60 : f32 to vector<8x1xf32>
    %183 = arith.maximumf %178, %182 : vector<8x1xf32>
    %184 = arith.divf %181, %183 : vector<8x1xf32>
    %185 = math.sqrt %184 : vector<8x1xf32>
    %186 = vector.broadcast %185 : vector<8x1xf32> to vector<8x16xf32>
    %187 = arith.mulf %154, %186 : vector<8x16xf32>
    %188 = vector.shape_cast %73 : vector<1x16xi1> to vector<1x16xi1>
    %189 = vector.broadcast %188 : vector<1x16xi1> to vector<8x16xi1>
    %190 = vector.shape_cast %171 : vector<8x1xf32> to vector<8x1xf32>
    %191 = vector.broadcast %190 : vector<8x1xf32> to vector<8x16xf32>
    %192 = arith.select %189, %191, %187 : vector<8x16xi1>, vector<8x16xf32>
    %193 = vector.shape_cast %192 : vector<8x16xf32> to vector<1x8x16xf32>
    %194 = tpu.iota {dimensions = array<i32: 2>} : vector<1x1x16xi32>
    %c0_i32_61 = arith.constant 0 : i32
    %195 = vector.broadcast %c0_i32_61 : i32 to vector<1x1x16xi32>
    %196 = arith.cmpi eq, %194, %195 : vector<1x1x16xi32>
    %c4_i32 = arith.constant 4 : i32
    %197 = vector.broadcast %c4_i32 : i32 to vector<1x1x16xi32>
    %198 = arith.cmpi eq, %194, %197 : vector<1x1x16xi32>
    %199 = arith.ori %196, %198 : vector<1x1x16xi1>
    %c8_i32 = arith.constant 8 : i32
    %200 = vector.broadcast %c8_i32 : i32 to vector<1x1x16xi32>
    %201 = arith.cmpi eq, %194, %200 : vector<1x1x16xi32>
    %202 = arith.ori %199, %201 : vector<1x1x16xi1>
    %c12_i32 = arith.constant 12 : i32
    %203 = vector.broadcast %c12_i32 : i32 to vector<1x1x16xi32>
    %204 = arith.cmpi eq, %194, %203 : vector<1x1x16xi32>
    %205 = arith.ori %202, %204 : vector<1x1x16xi1>
    %cst_62 = arith.constant -1.000000e+00 : f32
    %cst_63 = arith.constant 1.000000e+00 : f32
    %206 = vector.broadcast %cst_62 : f32 to vector<1x1x16xf32>
    %207 = vector.broadcast %cst_63 : f32 to vector<1x1x16xf32>
    %208 = arith.select %205, %206, %207 : vector<1x1x16xi1>, vector<1x1x16xf32>
    %c0_i32_64 = arith.constant 0 : i32
    %209 = vector.broadcast %c0_i32_64 : i32 to vector<1x1x16xi32>
    %210 = arith.cmpi sge, %194, %209 : vector<1x1x16xi32>
    %c4_i32_65 = arith.constant 4 : i32
    %211 = vector.broadcast %c4_i32_65 : i32 to vector<1x1x16xi32>
    %212 = arith.cmpi slt, %194, %211 : vector<1x1x16xi32>
    %213 = arith.andi %210, %212 : vector<1x1x16xi1>
    %214 = arith.extui %213 : vector<1x1x16xi1> to vector<1x1x16xi32>
    %215 = arith.sitofp %214 : vector<1x1x16xi32> to vector<1x1x16xf32>
    %c4_i32_66 = arith.constant 4 : i32
    %216 = vector.broadcast %c4_i32_66 : i32 to vector<1x1x16xi32>
    %217 = arith.cmpi sge, %194, %216 : vector<1x1x16xi32>
    %c8_i32_67 = arith.constant 8 : i32
    %218 = vector.broadcast %c8_i32_67 : i32 to vector<1x1x16xi32>
    %219 = arith.cmpi slt, %194, %218 : vector<1x1x16xi32>
    %220 = arith.andi %217, %219 : vector<1x1x16xi1>
    %221 = arith.extui %220 : vector<1x1x16xi1> to vector<1x1x16xi32>
    %222 = arith.sitofp %221 : vector<1x1x16xi32> to vector<1x1x16xf32>
    %c8_i32_68 = arith.constant 8 : i32
    %223 = vector.broadcast %c8_i32_68 : i32 to vector<1x1x16xi32>
    %224 = arith.cmpi sge, %194, %223 : vector<1x1x16xi32>
    %c12_i32_69 = arith.constant 12 : i32
    %225 = vector.broadcast %c12_i32_69 : i32 to vector<1x1x16xi32>
    %226 = arith.cmpi slt, %194, %225 : vector<1x1x16xi32>
    %227 = arith.andi %224, %226 : vector<1x1x16xi1>
    %228 = arith.extui %227 : vector<1x1x16xi1> to vector<1x1x16xi32>
    %229 = arith.sitofp %228 : vector<1x1x16xi32> to vector<1x1x16xf32>
    %c12_i32_70 = arith.constant 12 : i32
    %230 = vector.broadcast %c12_i32_70 : i32 to vector<1x1x16xi32>
    %231 = arith.cmpi sge, %194, %230 : vector<1x1x16xi32>
    %c16_i32 = arith.constant 16 : i32
    %232 = vector.broadcast %c16_i32 : i32 to vector<1x1x16xi32>
    %233 = arith.cmpi slt, %194, %232 : vector<1x1x16xi32>
    %234 = arith.andi %231, %233 : vector<1x1x16xi1>
    %235 = arith.extui %234 : vector<1x1x16xi1> to vector<1x1x16xi32>
    %236 = arith.sitofp %235 : vector<1x1x16xi32> to vector<1x1x16xf32>
    %237 = vector.shape_cast %215 : vector<1x1x16xf32> to vector<1x1x16xf32>
    %238 = vector.broadcast %237 : vector<1x1x16xf32> to vector<1x8x16xf32>
    %239 = vector.shape_cast %222 : vector<1x1x16xf32> to vector<1x1x16xf32>
    %240 = vector.broadcast %239 : vector<1x1x16xf32> to vector<1x8x16xf32>
    %241 = vector.shape_cast %229 : vector<1x1x16xf32> to vector<1x1x16xf32>
    %242 = vector.broadcast %241 : vector<1x1x16xf32> to vector<1x8x16xf32>
    %243 = vector.shape_cast %236 : vector<1x1x16xf32> to vector<1x1x16xf32>
    %244 = vector.broadcast %243 : vector<1x1x16xf32> to vector<1x8x16xf32>
    %245 = tpu.concatenate %238, %240, %242, %244 in 1 : vector<1x8x16xf32>, vector<1x8x16xf32>, vector<1x8x16xf32>, vector<1x8x16xf32> -> vector<1x32x16xf32>
    %246 = vector.broadcast %208 : vector<1x1x16xf32> to vector<1x8x16xf32>
    %247 = arith.mulf %113, %246 : vector<1x8x16xf32>
    %248 = tpu.concatenate %247, %247, %247, %247 in 1 : vector<1x8x16xf32>, vector<1x8x16xf32>, vector<1x8x16xf32>, vector<1x8x16xf32> -> vector<1x32x16xf32>
    %249 = arith.mulf %248, %245 : vector<1x32x16xf32>
    "tpu.trace_start"() <{level = 10 : i32, message = "bqd,bkd->bqk"}> : () -> ()
    %cst_71 = arith.constant dense<0.000000e+00> : vector<1x32x8xf32>
    %250 = tpu.matmul %249, %153, %cst_71 {dimension_numbers = #tpu.dot_dimension_numbers<[2], [2], [1], [1], [0, 0, 0, 1, 1, 1], [0], [0]>} : vector<1x32x16xf32>, vector<1x8x16xf32>, vector<1x32x8xf32> -> vector<1x32x8xf32>
    "tpu.trace_stop"() : () -> ()
    %cst_72 = arith.constant dense<0xFF800000> : vector<1x32xf32>
    %251 = vector.multi_reduction <maximumf>, %250, %cst_72 [2] : vector<1x32x8xf32> to vector<1x32xf32>
    %252 = vector.shape_cast %251 : vector<1x32xf32> to vector<1x32x1xf32>
    %253 = vector.broadcast %252 : vector<1x32x1xf32> to vector<1x32x8xf32>
    %254 = arith.subf %250, %253 : vector<1x32x8xf32>
    %255 = vector.broadcast %2 : f32 to vector<1x32x8xf32>
    %256 = arith.mulf %254, %255 : vector<1x32x8xf32>
    %257 = math.exp %256 : vector<1x32x8xf32>
    %258 = arith.truncf %257 : vector<1x32x8xf32> to vector<1x32x8xbf16>
    %259 = arith.truncf %193 : vector<1x8x16xf32> to vector<1x8x16xbf16>
    "tpu.trace_start"() <{level = 10 : i32, message = "bqk,bkd->bqd"}> : () -> ()
    %cst_73 = arith.constant dense<0.000000e+00> : vector<1x32x16xf32>
    %260 = tpu.matmul %258, %259, %cst_73 {dimension_numbers = #tpu.dot_dimension_numbers<[2], [1], [1], [2], [0, 0, 0, 1, 1, 2], [0], [0]>} : vector<1x32x8xbf16>, vector<1x8x16xbf16>, vector<1x32x16xf32> -> vector<1x32x16xf32>
    "tpu.trace_stop"() : () -> ()
    %261 = arith.mulf %260, %245 : vector<1x32x16xf32>
    %262 = arith.mulf %261, %261 : vector<1x32x16xf32>
    %263 = vector.broadcast %208 : vector<1x1x16xf32> to vector<1x32x16xf32>
    %264 = arith.mulf %262, %263 : vector<1x32x16xf32>
    %cst_74 = arith.constant dense<0.000000e+00> : vector<1x32xf32>
    %265 = vector.multi_reduction <add>, %264, %cst_74 [2] : vector<1x32x16xf32> to vector<1x32xf32>
    %266 = vector.shape_cast %265 : vector<1x32xf32> to vector<1x32x1xf32>
    %267 = math.absf %266 : vector<1x32x1xf32>
    %cst_75 = arith.constant 9.99999993E-9 : f32
    %268 = vector.broadcast %cst_75 : f32 to vector<1x32x1xf32>
    %269 = arith.maximumf %267, %268 : vector<1x32x1xf32>
    %270 = math.rsqrt %269 : vector<1x32x1xf32>
    %271 = vector.broadcast %270 : vector<1x32x1xf32> to vector<1x32x16xf32>
    %272 = arith.mulf %261, %271 : vector<1x32x16xf32>
    %273 = vector.extract_strided_slice %272 {offsets = [0, 0, 0], sizes = [1, 8, 16], strides = [1, 1, 1]} : vector<1x32x16xf32> to vector<1x8x16xf32>
    %274 = vector.extract_strided_slice %272 {offsets = [0, 8, 0], sizes = [1, 8, 16], strides = [1, 1, 1]} : vector<1x32x16xf32> to vector<1x8x16xf32>
    %275 = arith.addf %273, %274 : vector<1x8x16xf32>
    %276 = vector.extract_strided_slice %272 {offsets = [0, 16, 0], sizes = [1, 8, 16], strides = [1, 1, 1]} : vector<1x32x16xf32> to vector<1x8x16xf32>
    %277 = arith.addf %275, %276 : vector<1x8x16xf32>
    %278 = vector.extract_strided_slice %272 {offsets = [0, 24, 0], sizes = [1, 8, 16], strides = [1, 1, 1]} : vector<1x32x16xf32> to vector<1x8x16xf32>
    %279 = arith.addf %277, %278 : vector<1x8x16xf32>
    %280 = vector.shape_cast %279 : vector<1x8x16xf32> to vector<8x16xf32>
    %cst_76 = arith.constant 0.000000e+00 : f32
    %281 = vector.shape_cast %73 : vector<1x16xi1> to vector<1x16xi1>
    %282 = vector.broadcast %281 : vector<1x16xi1> to vector<8x16xi1>
    %283 = vector.broadcast %cst_76 : f32 to vector<8x16xf32>
    %284 = arith.select %282, %280, %283 : vector<8x16xi1>, vector<8x16xf32>
    %cst_77 = arith.constant dense<0.000000e+00> : vector<8xf32>
    %285 = vector.multi_reduction <add>, %284, %cst_77 [1] : vector<8x16xf32> to vector<8xf32>
    %286 = vector.shape_cast %285 : vector<8xf32> to vector<8x1xf32>
    %cst_78 = arith.constant 1.00000012 : f32
    %287 = vector.broadcast %cst_78 : f32 to vector<8x1xf32>
    %288 = arith.maximumf %286, %287 : vector<8x1xf32>
    %289 = arith.mulf %288, %288 : vector<8x1xf32>
    %cst_79 = arith.constant 1.000000e+00 : f32
    %290 = vector.broadcast %cst_79 : f32 to vector<8x1xf32>
    %291 = arith.subf %289, %290 : vector<8x1xf32>
    %292 = math.sqrt %291 : vector<8x1xf32>
    %293 = arith.addf %288, %292 : vector<8x1xf32>
    %294 = math.log %293 : vector<8x1xf32>
    %cst_80 = arith.constant 1.000000e-07 : f32
    %295 = vector.broadcast %cst_80 : f32 to vector<8x1xf32>
    %296 = arith.maximumf %292, %295 : vector<8x1xf32>
    %297 = arith.divf %294, %296 : vector<8x1xf32>
    %298 = vector.broadcast %0 : f32 to vector<8x1xf32>
    %299 = arith.mulf %297, %298 : vector<8x1xf32>
    %300 = vector.broadcast %299 : vector<8x1xf32> to vector<8x16xf32>
    %301 = arith.mulf %280, %300 : vector<8x16xf32>
    %cst_81 = arith.constant 0.000000e+00 : f32
    %302 = vector.shape_cast %73 : vector<1x16xi1> to vector<1x16xi1>
    %303 = vector.broadcast %302 : vector<1x16xi1> to vector<8x16xi1>
    %304 = vector.broadcast %cst_81 : f32 to vector<8x16xf32>
    %305 = arith.select %303, %304, %301 : vector<8x16xi1>, vector<8x16xf32>
    %cst_82 = arith.constant dense<0.000000e+00> : vector<8xf32>
    %306 = vector.multi_reduction <add>, %305, %cst_82 [1] : vector<8x16xf32> to vector<8xf32>
    %307 = vector.shape_cast %306 : vector<8xf32> to vector<8x1xf32>
    %cst_83 = arith.constant 1.500000e+01 : f32
    %308 = vector.broadcast %cst_83 : f32 to vector<8x1xf32>
    %309 = arith.divf %307, %308 : vector<8x1xf32>
    %310 = vector.broadcast %309 : vector<8x1xf32> to vector<8x16xf32>
    %311 = arith.subf %301, %310 : vector<8x16xf32>
    %cst_84 = arith.constant 0.000000e+00 : f32
    %312 = vector.shape_cast %73 : vector<1x16xi1> to vector<1x16xi1>
    %313 = vector.broadcast %312 : vector<1x16xi1> to vector<8x16xi1>
    %314 = vector.broadcast %cst_84 : f32 to vector<8x16xf32>
    %315 = arith.select %313, %314, %311 : vector<8x16xi1>, vector<8x16xf32>
    %316 = arith.mulf %315, %315 : vector<8x16xf32>
    %cst_85 = arith.constant dense<0.000000e+00> : vector<8xf32>
    %317 = vector.multi_reduction <add>, %316, %cst_85 [1] : vector<8x16xf32> to vector<8xf32>
    %318 = vector.shape_cast %317 : vector<8xf32> to vector<8x1xf32>
    %cst_86 = arith.constant 1.500000e+01 : f32
    %319 = vector.broadcast %cst_86 : f32 to vector<8x1xf32>
    %320 = arith.divf %318, %319 : vector<8x1xf32>
    %cst_87 = arith.constant 9.99999974E-6 : f32
    %321 = vector.broadcast %cst_87 : f32 to vector<8x1xf32>
    %322 = arith.addf %320, %321 : vector<8x1xf32>
    %323 = math.rsqrt %322 : vector<8x1xf32>
    %324 = vector.broadcast %323 : vector<8x1xf32> to vector<8x16xf32>
    %325 = arith.mulf %315, %324 : vector<8x16xf32>
    %c0_88 = arith.constant 0 : index
    %c0_89 = arith.constant 0 : index
    %326 = vector.load %arg10[%c0_88, %c0_89] : memref<1x16xf32, #tpu.memory_space<vmem>>, vector<1x16xf32>
    %327 = vector.broadcast %326 : vector<1x16xf32> to vector<8x16xf32>
    %328 = arith.mulf %325, %327 : vector<8x16xf32>
    %c0_90 = arith.constant 0 : index
    %c0_91 = arith.constant 0 : index
    %329 = vector.load %arg11[%c0_90, %c0_91] : memref<1x16xf32, #tpu.memory_space<vmem>>, vector<1x16xf32>
    %330 = vector.broadcast %329 : vector<1x16xf32> to vector<8x16xf32>
    %331 = arith.addf %328, %330 : vector<8x16xf32>
    %332 = arith.truncf %331 : vector<8x16xf32> to vector<8x16xbf16>
    %c0_92 = arith.constant 0 : index
    %c0_93 = arith.constant 0 : index
    %333 = vector.load %arg12[%c0_92, %c0_93] : memref<16x32xbf16, #tpu.memory_space<vmem>>, vector<16x32xbf16>
    %cst_94 = arith.constant dense<0.000000e+00> : vector<8x32xf32>
    %334 = tpu.matmul %332, %333, %cst_94 {dimension_numbers = #tpu.dot_dimension_numbers<[1], [0], [0], [1], [0, 0, 1, 1], [], []>} : vector<8x16xbf16>, vector<16x32xbf16>, vector<8x32xf32> -> vector<8x32xf32>
    %c0_95 = arith.constant 0 : index
    %c0_96 = arith.constant 0 : index
    %335 = vector.load %arg13[%c0_95, %c0_96] : memref<1x32xf32, #tpu.memory_space<vmem>>, vector<1x32xf32>
    %336 = vector.broadcast %335 : vector<1x32xf32> to vector<8x32xf32>
    %337 = arith.addf %334, %336 : vector<8x32xf32>
    %cst_97 = arith.constant 0.000000e+00 : f32
    %338 = vector.broadcast %cst_97 : f32 to vector<8x32xf32>
    %339 = arith.maximumf %337, %338 : vector<8x32xf32>
    %340 = vector.shape_cast %339 : vector<8x32xf32> to vector<1x8x32xf32>
    %c0_98 = arith.constant 0 : index
    %c0_99 = arith.constant 0 : index
    %c0_100 = arith.constant 0 : index
    %341 = vector.load %arg14[%c0_98, %c0_99, %c0_100] : memref<1x8x32xf32, #tpu.memory_space<vmem>>, vector<1x8x32xf32>
    tpu.vector_store %arg14[%c0_98, %c0_99, %c0_100], %340 {strides = array<i32>} : memref<1x8x32xf32, #tpu.memory_space<vmem>>, vector<1x8x32xf32>,
    return
  }
  func.func @transform_0(%arg0: i32) -> i32 {
    %c0_i32 = arith.constant 0 : i32
    %c0_i32_0 = arith.constant 0 : i32
    return %c0_i32 : i32
  }
  func.func @transform_1(%arg0: i32) -> (i32, i32, i32) {
    %c0_i32 = arith.constant 0 : i32
    %c0_i32_0 = arith.constant 0 : i32
    %c0_i32_1 = arith.constant 0 : i32
    return %arg0, %c0_i32, %c0_i32_0 : i32, i32, i32
  }
  func.func @transform_2(%arg0: i32) -> (i32, i32) {
    %c0_i32 = arith.constant 0 : i32
    %c0_i32_0 = arith.constant 0 : i32
    %c0_i32_1 = arith.constant 0 : i32
    return %c0_i32, %c0_i32_0 : i32, i32
  }
  func.func @transform_3(%arg0: i32) -> (i32, i32) {
    %c0_i32 = arith.constant 0 : i32
    %c0_i32_0 = arith.constant 0 : i32
    %c0_i32_1 = arith.constant 0 : i32
    return %c0_i32, %c0_i32_0 : i32, i32
  }
  func.func @transform_4(%arg0: i32) -> (i32, i32) {
    %c0_i32 = arith.constant 0 : i32
    %c0_i32_0 = arith.constant 0 : i32
    %c0_i32_1 = arith.constant 0 : i32
    return %c0_i32, %c0_i32_0 : i32, i32
  }
  func.func @transform_5(%arg0: i32) -> (i32, i32) {
    %c0_i32 = arith.constant 0 : i32
    %c0_i32_0 = arith.constant 0 : i32
    %c0_i32_1 = arith.constant 0 : i32
    return %c0_i32, %c0_i32_0 : i32, i32
  }
  func.func @transform_6(%arg0: i32) -> (i32, i32) {
    %c0_i32 = arith.constant 0 : i32
    %c0_i32_0 = arith.constant 0 : i32
    %c0_i32_1 = arith.constant 0 : i32
    return %c0_i32, %c0_i32_0 : i32, i32
  }
  func.func @transform_7(%arg0: i32) -> (i32, i32) {
    %c0_i32 = arith.constant 0 : i32
    %c0_i32_0 = arith.constant 0 : i32
    %c0_i32_1 = arith.constant 0 : i32
    return %c0_i32, %c0_i32_0 : i32, i32
  }
  func.func @transform_8(%arg0: i32) -> (i32, i32) {
    %c0_i32 = arith.constant 0 : i32
    %c0_i32_0 = arith.constant 0 : i32
    %c0_i32_1 = arith.constant 0 : i32
    return %c0_i32, %c0_i32_0 : i32, i32
  }
  func.func @transform_9(%arg0: i32) -> (i32, i32) {
    %c0_i32 = arith.constant 0 : i32
    %c0_i32_0 = arith.constant 0 : i32
    %c0_i32_1 = arith.constant 0 : i32
    return %c0_i32, %c0_i32_0 : i32, i32
  }
  func.func @transform_10(%arg0: i32) -> (i32, i32) {
    %c0_i32 = arith.constant 0 : i32
    %c0_i32_0 = arith.constant 0 : i32
    %c0_i32_1 = arith.constant 0 : i32
    return %c0_i32, %c0_i32_0 : i32, i32
  }
  func.func @transform_11(%arg0: i32) -> (i32, i32) {
    %c0_i32 = arith.constant 0 : i32
    %c0_i32_0 = arith.constant 0 : i32
    %c0_i32_1 = arith.constant 0 : i32
    return %c0_i32, %c0_i32_0 : i32, i32
  }
  func.func @transform_12(%arg0: i32) -> (i32, i32) {
    %c0_i32 = arith.constant 0 : i32
    %c0_i32_0 = arith.constant 0 : i32
    %c0_i32_1 = arith.constant 0 : i32
    return %c0_i32, %c0_i32_0 : i32, i32
  }
  func.func @transform_13(%arg0: i32) -> (i32, i32, i32) {
    %c0_i32 = arith.constant 0 : i32
    %c0_i32_0 = arith.constant 0 : i32
    %c0_i32_1 = arith.constant 0 : i32
    return %arg0, %c0_i32, %c0_i32_0 : i32, i32, i32
  }
}

</mosaic_0001>

<llo_original>
// kernel: tpu_custom_call.1
$region0: #{tpu_custom_call.1}
  #allocation0 [shape = 'u32[]', space=smem, size = 0x4, offset = 0x4, fixed_abs, tag = 'smem constant byte address 0x4 - core index']
  #allocation1 [shape = 'u32[144,128]{1,0:T(1,128)}', space=vmem, size = 0x12000, scoped, tag = 'internal scratch']
  %s0 = inlined_call_operand.vmem [shape: f32[3], index: 0, kind: input, shape index: {}]
  %s1 = inlined_call_operand.vmem [shape: f32[2,8,32], index: 1, kind: input, shape index: {}]
  %s2 = inlined_call_operand.vmem [shape: f32[1,32], index: 2, kind: input, shape index: {}]
  %s3 = inlined_call_operand.hbm [shape: f32[1,32], index: 3, kind: input, shape index: {}]
  %s4 = inlined_call_operand.vmem [shape: bf16[32,15], index: 4, kind: input, shape index: {}]
  %s5 = inlined_call_operand.hbm [shape: f32[1,15], index: 5, kind: input, shape index: {}]
  %s6 = inlined_call_operand.vmem [shape: f32[1,48], index: 6, kind: input, shape index: {}]
  %s7 = inlined_call_operand.vmem [shape: bf16[15,48], index: 7, kind: input, shape index: {}]
  %s8 = inlined_call_operand.vmem [shape: f32[1,48], index: 8, kind: input, shape index: {}]
  %s9 = inlined_call_operand.vmem [shape: f32[1,16], index: 9, kind: input, shape index: {}]
  %s10 = inlined_call_operand.vmem [shape: f32[1,16], index: 10, kind: input, shape index: {}]
  %s11 = inlined_call_operand.vmem [shape: bf16[16,32], index: 11, kind: input, shape index: {}]
  %s12 = inlined_call_operand.vmem [shape: f32[1,32], index: 12, kind: input, shape index: {}]
  %s13 = inlined_call_operand.hbm [shape: f32[2,8,32], index: 13, kind: output, shape index: {}]
  %s14 = sld [smem:[#allocation0]]
  $region97: #{tpu_custom_call.1} parent=0
    _
  %s16 = ssub.s32 1, %s14
  %s17 = scalar_select 0, %s16, %s14
  $region1: #{tpu_custom_call.1} parent=0
    #allocation2 [shape = 'u8[512]{0}', space=smem, size = 0x200, scoped, tag = 'input window, operand 0, single buffered']
    #allocation3 [shape = 's32[2]{0}', space=sflag, size = 0x8, scoped, tag = 'scoped memory for tpu_custom_call.1']
    #allocation4 [shape = 's32[2]{0}', space=sflag, size = 0x8, scoped, tag = 'scoped memory for tpu_custom_call.1']
    #allocation5 [shape = 's32[2]{0}', space=sflag, size = 0x8, scoped, tag = 'scoped memory for tpu_custom_call.1']
    #allocation6 [shape = 'u8[512]{0}', space=vmem, size = 0x400, scoped, tag = 'input window, operand 3, single buffered']
    #allocation7 [shape = 'u8[512]{0}', space=vmem, size = 0x400, scoped, tag = 'input window, operand 5, single buffered']
    #allocation8 [shape = 's32[1]{0}', space=sflag, size = 0x4, scoped, tag = 'scoped memory for tpu_custom_call.1']
    #allocation9 [shape = 'u8[8192]{0}', space=vmem, size = 0x2000, scoped, tag = 'output window, operand 0']
    %18 = vsyncpa [#allocation5], 0
    %19 = vsyncpa [#allocation3], 0
    %20 = vsyncpa [#allocation8], 0
    %21 = vsyncpa [#allocation4], 0
    %s22 = scalar_lea.sflag [#allocation4], 1
    %23 = vsyncpa %s22, 0
    loop: start=0, step=1, limit=4
    $region2: #{tpu_custom_call.1} parent=1 // loop_pre_header
      _
    $region3: #{tpu_custom_call.1} parent=1 // loop_header
      %s25 = sphi 0, %s29
      %p26 = scmp.ge.s32.totalorder %s25, 4
      %s33 = sphi 0, %s33
      %s35 = sphi 0, %s33
      %s36 = sphi 0, %s35
      %s50 = sphi 0, %s36
      %s56 = sphi 0, %s58
      %s59 = sphi 0, %s56
      %s60 = sphi 0, %s59
      %s76 = sphi 0, %s60
      %s80 = sphi 0, %s80
      %s82 = sphi 0, %s80
      %s83 = sphi 0, %s82
      %s97 = sphi 0, %s83
      %s101 = sphi 0, %s101
      %s103 = sphi 0, %s101
      %s104 = sphi 0, %s103
      %s118 = sphi 0, %s104
      %s122 = sphi 0, %s122
      %s124 = sphi 0, %s122
      %s125 = sphi 0, %s124
      %s139 = sphi 0, %s125
      %s143 = sphi 0, %s143
      %s145 = sphi 0, %s143
      %s146 = sphi 0, %s145
      %s160 = sphi 0, %s146
      %s164 = sphi 0, %s164
      %s166 = sphi 0, %s164
      %s167 = sphi 0, %s166
      %s181 = sphi 0, %s167
      %s185 = sphi 0, %s185
      %s187 = sphi 0, %s185
      %s188 = sphi 0, %s187
      %s202 = sphi 0, %s188
      %s206 = sphi 0, %s206
      %s208 = sphi 0, %s206
      %s209 = sphi 0, %s208
      %s223 = sphi 0, %s209
      %s227 = sphi 0, %s227
      %s229 = sphi 0, %s227
      %s230 = sphi 0, %s229
      %s244 = sphi 0, %s230
      %s248 = sphi 0, %s248
      %s250 = sphi 0, %s248
      %s251 = sphi 0, %s250
      %s265 = sphi 0, %s251
      %s269 = sphi 0, %s269
      %s271 = sphi 0, %s269
      %s272 = sphi 0, %s271
      %s286 = sphi 0, %s272
      %s290 = sphi 0, %s290
      %s292 = sphi 0, %s290
      %s293 = sphi 0, %s292
      %s307 = sphi 0, %s293
      %s313 = sphi 0, %s315
      %s316 = sphi 0, %s313
      %s317 = sphi 0, %s316
      %s333 = sphi 0, %s317
    $region4: #{tpu_custom_call.1} parent=1 // loop_header_branch
      %28 = sbr.rel (%p26) target = $region8
    $region5: #{tpu_custom_call.1} parent=1 // loop_body
      %s30 = ssub.s32 %s25, 1
      %s31 = ssub.s32 %s25, 2
      %s32 = sadd.s32 %s25, 1
      %s34 = sadd.s32 %s33, 1
      %p37 = scmp.eq.s32.totalorder %s25, 1
      %p38 = scmp.ne.s32.totalorder %s33, %s35
      %p39 = scmp.eq.s32.totalorder %s25, 0
      %p40 = por %p38, %p39
      %p41 = scmp.ne.s32.totalorder %s33, %s35
      %p42 = scmp.eq.s32.totalorder %s30, 1
      %p43 = por %p41, %p42
      %p44 = scmp.ne.s32.totalorder %s35, %s36
      %p45 = scmp.eq.s32.totalorder %s30, 0
      %p46 = por %p44, %p45
      %p47 = scmp.ne.s32.totalorder %s35, %s36
      %p48 = scmp.eq.s32.totalorder %s31, 1
      %p49 = por %p47, %p48
      %p51 = scmp.ne.s32.totalorder %s36, %s50
      %p52 = scmp.eq.s32.totalorder %s31, 0
      %p53 = por %p51, %p52
      %s54 = ssub.s32 %s25, %s32
      %p55 = scmp.eq.s32.totalorder %s54, 0
      %s57 = sadd.s32 %s56, 1
      %s58 = scalar_select %p55, %s56, %s57
      %p61 = pneg %p55
      %p62 = scmp.eq.s32.totalorder %s25, 1
      %p63 = por %p61, %p62
      %p64 = scmp.ne.s32.totalorder %s56, %s59
      %p65 = scmp.eq.s32.totalorder %s25, 0
      %p66 = por %p64, %p65
      %p67 = scmp.ne.s32.totalorder %s56, %s59
      %p68 = scmp.eq.s32.totalorder %s30, 1
      %p69 = por %p67, %p68
      %p70 = scmp.ne.s32.totalorder %s59, %s60
      %p71 = scmp.eq.s32.totalorder %s30, 0
      %p72 = por %p70, %p71
      %p73 = scmp.ne.s32.totalorder %s59, %s60
      %p74 = scmp.eq.s32.totalorder %s31, 1
      %p75 = por %p73, %p74
      %p77 = scmp.ne.s32.totalorder %s60, %s76
      %p78 = scmp.eq.s32.totalorder %s31, 0
      %p79 = por %p77, %p78
      %s81 = sadd.s32 %s80, 1
      %p84 = scmp.eq.s32.totalorder %s25, 1
      %p85 = scmp.ne.s32.totalorder %s80, %s82
      %p86 = scmp.eq.s32.totalorder %s25, 0
      %p87 = por %p85, %p86
      %p88 = scmp.ne.s32.totalorder %s80, %s82
      %p89 = scmp.eq.s32.totalorder %s30, 1
      %p90 = por %p88, %p89
      %p91 = scmp.ne.s32.totalorder %s82, %s83
      %p92 = scmp.eq.s32.totalorder %s30, 0
      %p93 = por %p91, %p92
      %p94 = scmp.ne.s32.totalorder %s82, %s83
      %p95 = scmp.eq.s32.totalorder %s31, 1
      %p96 = por %p94, %p95
      %p98 = scmp.ne.s32.totalorder %s83, %s97
      %p99 = scmp.eq.s32.totalorder %s31, 0
      %p100 = por %p98, %p99
      %s102 = sadd.s32 %s101, 1
      %p105 = scmp.eq.s32.totalorder %s25, 1
      %p106 = scmp.ne.s32.totalorder %s101, %s103
      %p107 = scmp.eq.s32.totalorder %s25, 0
      %p108 = por %p106, %p107
      %p109 = scmp.ne.s32.totalorder %s101, %s103
      %p110 = scmp.eq.s32.totalorder %s30, 1
      %p111 = por %p109, %p110
      %p112 = scmp.ne.s32.totalorder %s103, %s104
      %p113 = scmp.eq.s32.totalorder %s30, 0
      %p114 = por %p112, %p113
      %p115 = scmp.ne.s32.totalorder %s103, %s104
      %p116 = scmp.eq.s32.totalorder %s31, 1
      %p117 = por %p115, %p116
      %p119 = scmp.ne.s32.totalorder %s104, %s118
      %p120 = scmp.eq.s32.totalorder %s31, 0
      %p121 = por %p119, %p120
      %s123 = sadd.s32 %s122, 1
      %p126 = scmp.eq.s32.totalorder %s25, 1
      %p127 = scmp.ne.s32.totalorder %s122, %s124
      %p128 = scmp.eq.s32.totalorder %s25, 0
      %p129 = por %p127, %p128
      %p130 = scmp.ne.s32.totalorder %s122, %s124
      %p131 = scmp.eq.s32.totalorder %s30, 1
      %p132 = por %p130, %p131
      %p133 = scmp.ne.s32.totalorder %s124, %s125
      %p134 = scmp.eq.s32.totalorder %s30, 0
      %p135 = por %p133, %p134
      %p136 = scmp.ne.s32.totalorder %s124, %s125
      %p137 = scmp.eq.s32.totalorder %s31, 1
      %p138 = por %p136, %p137
      %p140 = scmp.ne.s32.totalorder %s125, %s139
      %p141 = scmp.eq.s32.totalorder %s31, 0
      %p142 = por %p140, %p141
      %s144 = sadd.s32 %s143, 1
      %p147 = scmp.eq.s32.totalorder %s25, 1
      %p148 = scmp.ne.s32.totalorder %s143, %s145
      %p149 = scmp.eq.s32.totalorder %s25, 0
      %p150 = por %p148, %p149
      %p151 = scmp.ne.s32.totalorder %s143, %s145
      %p152 = scmp.eq.s32.totalorder %s30, 1
      %p153 = por %p151, %p152
      %p154 = scmp.ne.s32.totalorder %s145, %s146
      %p155 = scmp.eq.s32.totalorder %s30, 0
      %p156 = por %p154, %p155
      %p157 = scmp.ne.s32.totalorder %s145, %s146
      %p158 = scmp.eq.s32.totalorder %s31, 1
      %p159 = por %p157, %p158
      %p161 = scmp.ne.s32.totalorder %s146, %s160
      %p162 = scmp.eq.s32.totalorder %s31, 0
      %p163 = por %p161, %p162
      %s165 = sadd.s32 %s164, 1
      %p168 = scmp.eq.s32.totalorder %s25, 1
      %p169 = scmp.ne.s32.totalorder %s164, %s166
      %p170 = scmp.eq.s32.totalorder %s25, 0
      %p171 = por %p169, %p170
      %p172 = scmp.ne.s32.totalorder %s164, %s166
      %p173 = scmp.eq.s32.totalorder %s30, 1
      %p174 = por %p172, %p173
      %p175 = scmp.ne.s32.totalorder %s166, %s167
      %p176 = scmp.eq.s32.totalorder %s30, 0
      %p177 = por %p175, %p176
      %p178 = scmp.ne.s32.totalorder %s166, %s167
      %p179 = scmp.eq.s32.totalorder %s31, 1
      %p180 = por %p178, %p179
      %p182 = scmp.ne.s32.totalorder %s167, %s181
      %p183 = scmp.eq.s32.totalorder %s31, 0
      %p184 = por %p182, %p183
      %s186 = sadd.s32 %s185, 1
      %p189 = scmp.eq.s32.totalorder %s25, 1
      %p190 = scmp.ne.s32.totalorder %s185, %s187
      %p191 = scmp.eq.s32.totalorder %s25, 0
      %p192 = por %p190, %p191
      %p193 = scmp.ne.s32.totalorder %s185, %s187
      %p194 = scmp.eq.s32.totalorder %s30, 1
      %p195 = por %p193, %p194
      %p196 = scmp.ne.s32.totalorder %s187, %s188
      %p197 = scmp.eq.s32.totalorder %s30, 0
      %p198 = por %p196, %p197
      %p199 = scmp.ne.s32.totalorder %s187, %s188
      %p200 = scmp.eq.s32.totalorder %s31, 1
      %p201 = por %p199, %p200
      %p203 = scmp.ne.s32.totalorder %s188, %s202
      %p204 = scmp.eq.s32.totalorder %s31, 0
      %p205 = por %p203, %p204
      %s207 = sadd.s32 %s206, 1
      %p210 = scmp.eq.s32.totalorder %s25, 1
      %p211 = scmp.ne.s32.totalorder %s206, %s208
      %p212 = scmp.eq.s32.totalorder %s25, 0
      %p213 = por %p211, %p212
      %p214 = scmp.ne.s32.totalorder %s206, %s208
      %p215 = scmp.eq.s32.totalorder %s30, 1
      %p216 = por %p214, %p215
      %p217 = scmp.ne.s32.totalorder %s208, %s209
      %p218 = scmp.eq.s32.totalorder %s30, 0
      %p219 = por %p217, %p218
      %p220 = scmp.ne.s32.totalorder %s208, %s209
      %p221 = scmp.eq.s32.totalorder %s31, 1
      %p222 = por %p220, %p221
      %p224 = scmp.ne.s32.totalorder %s209, %s223
      %p225 = scmp.eq.s32.totalorder %s31, 0
      %p226 = por %p224, %p225
      %s228 = sadd.s32 %s227, 1
      %p231 = scmp.eq.s32.totalorder %s25, 1
      %p232 = scmp.ne.s32.totalorder %s227, %s229
      %p233 = scmp.eq.s32.totalorder %s25, 0
      %p234 = por %p232, %p233
      %p235 = scmp.ne.s32.totalorder %s227, %s229
      %p236 = scmp.eq.s32.totalorder %s30, 1
      %p237 = por %p235, %p236
      %p238 = scmp.ne.s32.totalorder %s229, %s230
      %p239 = scmp.eq.s32.totalorder %s30, 0
      %p240 = por %p238, %p239
      %p241 = scmp.ne.s32.totalorder %s229, %s230
      %p242 = scmp.eq.s32.totalorder %s31, 1
      %p243 = por %p241, %p242
      %p245 = scmp.ne.s32.totalorder %s230, %s244
      %p246 = scmp.eq.s32.totalorder %s31, 0
      %p247 = por %p245, %p246
      %s249 = sadd.s32 %s248, 1
      %p252 = scmp.eq.s32.totalorder %s25, 1
      %p253 = scmp.ne.s32.totalorder %s248, %s250
      %p254 = scmp.eq.s32.totalorder %s25, 0
      %p255 = por %p253, %p254
      %p256 = scmp.ne.s32.totalorder %s248, %s250
      %p257 = scmp.eq.s32.totalorder %s30, 1
      %p258 = por %p256, %p257
      %p259 = scmp.ne.s32.totalorder %s250, %s251
      %p260 = scmp.eq.s32.totalorder %s30, 0
      %p261 = por %p259, %p260
      %p262 = scmp.ne.s32.totalorder %s250, %s251
      %p263 = scmp.eq.s32.totalorder %s31, 1
      %p264 = por %p262, %p263
      %p266 = scmp.ne.s32.totalorder %s251, %s265
      %p267 = scmp.eq.s32.totalorder %s31, 0
      %p268 = por %p266, %p267
      %s270 = sadd.s32 %s269, 1
      %p273 = scmp.eq.s32.totalorder %s25, 1
      %p274 = scmp.ne.s32.totalorder %s269, %s271
      %p275 = scmp.eq.s32.totalorder %s25, 0
      %p276 = por %p274, %p275
      %p277 = scmp.ne.s32.totalorder %s269, %s271
      %p278 = scmp.eq.s32.totalorder %s30, 1
      %p279 = por %p277, %p278
      %p280 = scmp.ne.s32.totalorder %s271, %s272
      %p281 = scmp.eq.s32.totalorder %s30, 0
      %p282 = por %p280, %p281
      %p283 = scmp.ne.s32.totalorder %s271, %s272
      %p284 = scmp.eq.s32.totalorder %s31, 1
      %p285 = por %p283, %p284
      %p287 = scmp.ne.s32.totalorder %s272, %s286
      %p288 = scmp.eq.s32.totalorder %s31, 0
      %p289 = por %p287, %p288
      %s291 = sadd.s32 %s290, 1
      %p294 = scmp.eq.s32.totalorder %s25, 1
      %p295 = scmp.ne.s32.totalorder %s290, %s292
      %p296 = scmp.eq.s32.totalorder %s25, 0
      %p297 = por %p295, %p296
      %p298 = scmp.ne.s32.totalorder %s290, %s292
      %p299 = scmp.eq.s32.totalorder %s30, 1
      %p300 = por %p298, %p299
      %p301 = scmp.ne.s32.totalorder %s292, %s293
      %p302 = scmp.eq.s32.totalorder %s30, 0
      %p303 = por %p301, %p302
      %p304 = scmp.ne.s32.totalorder %s292, %s293
      %p305 = scmp.eq.s32.totalorder %s31, 1
      %p306 = por %p304, %p305
      %p308 = scmp.ne.s32.totalorder %s293, %s307
      %p309 = scmp.eq.s32.totalorder %s31, 0
      %p310 = por %p308, %p309
      %s311 = ssub.s32 %s25, %s32
      %p312 = scmp.eq.s32.totalorder %s311, 0
      %s314 = sadd.s32 %s313, 1
      %s315 = scalar_select %p312, %s313, %s314
      %p318 = pneg %p312
      %p319 = scmp.eq.s32.totalorder %s25, 1
      %p320 = por %p318, %p319
      %p321 = scmp.ne.s32.totalorder %s313, %s316
      %p322 = scmp.eq.s32.totalorder %s25, 0
      %p323 = por %p321, %p322
      %p324 = scmp.ne.s32.totalorder %s313, %s316
      %p325 = scmp.eq.s32.totalorder %s30, 1
      %p326 = por %p324, %p325
      %p327 = scmp.ne.s32.totalorder %s316, %s317
      %p328 = scmp.eq.s32.totalorder %s30, 0
      %p329 = por %p327, %p328
      %p330 = scmp.ne.s32.totalorder %s316, %s317
      %p331 = scmp.eq.s32.totalorder %s31, 1
      %p332 = por %p330, %p331
      %p334 = scmp.ne.s32.totalorder %s317, %s333
      %p335 = scmp.eq.s32.totalorder %s31, 0
      %p336 = por %p334, %p335
      %p337 = scmp.le.s32.totalorder 1, %s25
      %p338 = scmp.lt.s32.totalorder %s25, 3
      %p339 = pnand %p337, %p338
      %p340 = pneg %p339
      // Predicated region
      $region9: #{tpu_custom_call.1} parent=5 // pred_check
        _
      $region10: #{tpu_custom_call.1} parent=5 // pred_check_branch
        %342 = sbr.rel (%p339) target = $region12
      $region11: #{tpu_custom_call.1} parent=5 // pred_region
        %s343 = ssub.s32 %s25, 1
        // Predicated region
        $region13: #{tpu_custom_call.1} parent=11 // pred_check
          %p344 = pneg %p46
        $region14: #{tpu_custom_call.1} parent=11 // pred_check_branch
          %346 = sbr.rel (%p344) target = $region16
        $region15: #{tpu_custom_call.1} parent=11 // pred_region
          %s348 = ssub.s32 16, 16
          %349 = vsyncadd [#allocation5], %s348
          %s351 = sshll.u32 %s0, 4
          %s352 = int_to_ptr.vmem [resolvable:$true] %s351
          %354 = dma.vmem_to_smem %s352, 16, [#allocation2], [#allocation5]
        $region16: #{tpu_custom_call.1} parent=11 // pred_fallthru
          _
        // Predicated region
        $region17: #{tpu_custom_call.1} parent=11 // pred_check
          %p355 = pneg %p93
        $region18: #{tpu_custom_call.1} parent=11 // pred_check_branch
          %357 = sbr.rel (%p355) target = $region20
        $region19: #{tpu_custom_call.1} parent=11 // pred_region
          _
        $region20: #{tpu_custom_call.1} parent=11 // pred_fallthru
          _
        // Predicated region
        $region21: #{tpu_custom_call.1} parent=11 // pred_check
          %p358 = pneg %p114
        $region22: #{tpu_custom_call.1} parent=11 // pred_check_branch
          %360 = sbr.rel (%p358) target = $region24
        $region23: #{tpu_custom_call.1} parent=11 // pred_region
          %s362 = ssub.s32 16, 16
          %363 = vsyncadd [#allocation3], %s362
          %s365 = sshll.u32 [#allocation6], 4
          %s366 = int_to_ptr.vmem [resolvable:$true] %s365
          %368 = dma.hbm_to_vmem [thread:$0]  %s3, 16, %s366, [#allocation3]
        $region24: #{tpu_custom_call.1} parent=11 // pred_fallthru
          _
        // Predicated region
        $region25: #{tpu_custom_call.1} parent=11 // pred_check
          %p369 = pneg %p135
        $region26: #{tpu_custom_call.1} parent=11 // pred_check_branch
          %371 = sbr.rel (%p369) target = $region28
        $region27: #{tpu_custom_call.1} parent=11 // pred_region
          _
        $region28: #{tpu_custom_call.1} parent=11 // pred_fallthru
          _
        // Predicated region
        $region29: #{tpu_custom_call.1} parent=11 // pred_check
          %p372 = pneg %p156
        $region30: #{tpu_custom_call.1} parent=11 // pred_check_branch
          %374 = sbr.rel (%p372) target = $region32
        $region31: #{tpu_custom_call.1} parent=11 // pred_region
          %s376 = ssub.s32 16, 16
          %377 = vsyncadd [#allocation8], %s376
          %s379 = sshll.u32 [#allocation7], 4
          %s380 = int_to_ptr.vmem [resolvable:$true] %s379
          %382 = dma.hbm_to_vmem [thread:$0]  %s5, 16, %s380, [#allocation8]
        $region32: #{tpu_custom_call.1} parent=11 // pred_fallthru
          _
        // Predicated region
        $region33: #{tpu_custom_call.1} parent=11 // pred_check
          %p383 = pneg %p177
        $region34: #{tpu_custom_call.1} parent=11 // pred_check_branch
          %385 = sbr.rel (%p383) target = $region36
        $region35: #{tpu_custom_call.1} parent=11 // pred_region
          _
        $region36: #{tpu_custom_call.1} parent=11 // pred_fallthru
          _
        // Predicated region
        $region37: #{tpu_custom_call.1} parent=11 // pred_check
          %p386 = pneg %p198
        $region38: #{tpu_custom_call.1} parent=11 // pred_check_branch
          %388 = sbr.rel (%p386) target = $region40
        $region39: #{tpu_custom_call.1} parent=11 // pred_region
          _
        $region40: #{tpu_custom_call.1} parent=11 // pred_fallthru
          _
        // Predicated region
        $region41: #{tpu_custom_call.1} parent=11 // pred_check
          %p389 = pneg %p219
        $region42: #{tpu_custom_call.1} parent=11 // pred_check_branch
          %391 = sbr.rel (%p389) target = $region44
        $region43: #{tpu_custom_call.1} parent=11 // pred_region
          _
        $region44: #{tpu_custom_call.1} parent=11 // pred_fallthru
          _
        // Predicated region
        $region45: #{tpu_custom_call.1} parent=11 // pred_check
          %p392 = pneg %p240
        $region46: #{tpu_custom_call.1} parent=11 // pred_check_branch
          %394 = sbr.rel (%p392) target = $region48
        $region47: #{tpu_custom_call.1} parent=11 // pred_region
          _
        $region48: #{tpu_custom_call.1} parent=11 // pred_fallthru
          _
        // Predicated region
        $region49: #{tpu_custom_call.1} parent=11 // pred_check
          %p395 = pneg %p261
        $region50: #{tpu_custom_call.1} parent=11 // pred_check_branch
          %397 = sbr.rel (%p395) target = $region52
        $region51: #{tpu_custom_call.1} parent=11 // pred_region
          _
        $region52: #{tpu_custom_call.1} parent=11 // pred_fallthru
          _
        // Predicated region
        $region53: #{tpu_custom_call.1} parent=11 // pred_check
          %p398 = pneg %p282
        $region54: #{tpu_custom_call.1} parent=11 // pred_check_branch
          %400 = sbr.rel (%p398) target = $region56
        $region55: #{tpu_custom_call.1} parent=11 // pred_region
          _
        $region56: #{tpu_custom_call.1} parent=11 // pred_fallthru
          _
        // Predicated region
        $region57: #{tpu_custom_call.1} parent=11 // pred_check
          %p401 = pneg %p303
        $region58: #{tpu_custom_call.1} parent=11 // pred_check_branch
          %403 = sbr.rel (%p401) target = $region60
        $region59: #{tpu_custom_call.1} parent=11 // pred_region
          _
        $region60: #{tpu_custom_call.1} parent=11 // pred_fallthru
          _
      $region12: #{tpu_custom_call.1} parent=5 // pred_fallthru
        _
      %p404 = scmp.lt.s32.totalorder %s25, 2
      // Predicated region
      $region61: #{tpu_custom_call.1} parent=5 // pred_check
        %p405 = pneg %p404
      $region62: #{tpu_custom_call.1} parent=5 // pred_check_branch
        %407 = sbr.rel (%p405) target = $region64
      $region63: #{tpu_custom_call.1} parent=5 // pred_region
        // Predicated region
        $region65: #{tpu_custom_call.1} parent=63 // pred_check
          %p408 = pneg %p66
        $region66: #{tpu_custom_call.1} parent=63 // pred_check_branch
          %410 = sbr.rel (%p408) target = $region68
        $region67: #{tpu_custom_call.1} parent=63 // pred_region
          %p411 = scmp.lt.s32.totalorder %s25, 1
          %s412 = scalar_select %p411, %s25, 1
          %s413 = smul.addr %s412, 8
          %s414 = scalar_lea.vmem %s1, %s413
        $region68: #{tpu_custom_call.1} parent=63 // pred_fallthru
          _
      $region64: #{tpu_custom_call.1} parent=5 // pred_fallthru
        _
      %p415 = scmp.le.s32.totalorder 1, %s25
      %p416 = scmp.lt.s32.totalorder %s25, 3
      %p417 = pnand %p415, %p416
      %p418 = pneg %p417
      // Predicated region
      $region69: #{tpu_custom_call.1} parent=5 // pred_check
        _
      $region70: #{tpu_custom_call.1} parent=5 // pred_check_branch
        %420 = sbr.rel (%p417) target = $region72
      $region71: #{tpu_custom_call.1} parent=5 // pred_region
        %s421 = ssub.s32 %s25, 1
        // Predicated region
        $region73: #{tpu_custom_call.1} parent=71 // pred_check
          %p422 = pneg %p46
        $region74: #{tpu_custom_call.1} parent=71 // pred_check_branch
          %424 = sbr.rel (%p422) target = $region76
        $region75: #{tpu_custom_call.1} parent=71 // pred_region
          %425 = dma.done [#allocation5], 16
        $region76: #{tpu_custom_call.1} parent=71 // pred_fallthru
          _
        // Predicated region
        $region77: #{tpu_custom_call.1} parent=71 // pred_check
          %p426 = pneg %p114
        $region78: #{tpu_custom_call.1} parent=71 // pred_check_branch
          %428 = sbr.rel (%p426) target = $region80
        $region79: #{tpu_custom_call.1} parent=71 // pred_region
          %429 = dma.done [#allocation3], 16
        $region80: #{tpu_custom_call.1} parent=71 // pred_fallthru
          _
        // Predicated region
        $region81: #{tpu_custom_call.1} parent=71 // pred_check
          %p430 = pneg %p156
        $region82: #{tpu_custom_call.1} parent=71 // pred_check_branch
          %432 = sbr.rel (%p430) target = $region84
        $region83: #{tpu_custom_call.1} parent=71 // pred_region
          %433 = dma.done [#allocation8], 16
        $region84: #{tpu_custom_call.1} parent=71 // pred_fallthru
          _
        %434 = sfence
        %p435 = pneg %p46
        %p436 = pneg %p43
        %p437 = scmp.lt.s32.totalorder %s30, 1
        %s438 = scalar_select %p437, %s30, 1
        %s439 = smul.addr %s438, 8
        %s440 = scalar_lea.vmem %s1, %s439
        %p441 = pneg %p72
        %p442 = pneg %p69
        %p443 = pneg %p93
        %p444 = pneg %p90
        %p445 = pneg %p114
        %p446 = pneg %p111
        %p447 = pneg %p135
        %p448 = pneg %p132
        %p449 = pneg %p156
        %p450 = pneg %p153
        %p451 = pneg %p177
        %p452 = pneg %p174
        %p453 = pneg %p198
        %p454 = pneg %p195
        %p455 = pneg %p219
        %p456 = pneg %p216
        %p457 = pneg %p240
        %p458 = pneg %p237
        %p459 = pneg %p261
        %p460 = pneg %p258
        %p461 = pneg %p282
        %p462 = pneg %p279
        %p463 = pneg %p303
        %p464 = pneg %p300
        %p465 = pneg %p329
        %p466 = pneg %p326
        %s467 = sand.u32 %s316, 1
        %s468 = scalar_lea.sflag [#allocation4], %s467
        %s469 = sand.u32 %s316, 1
        %s470 = smul.addr %s469, 8
        %s471 = scalar_lea.vmem [#allocation9], %s470
        %p472 = scmp.lt.s32.totalorder %s30, 1
        %s473 = scalar_select %p472, %s30, 1
        %s474 = smul.addr %s473, 8
        %s475 = scalar_lea.vmem %s1, %s474
        %s477 = sld [smem:[#allocation2]]
        %s478 = sld [smem:[#allocation2 + $0x1]]
        %s479 = sld [smem:[#allocation2 + $0x2]]
        %v480 = vld [vmem:[%s475] sm:$0xff]
        %vm481 = vcmask 261120
        %v482 = vsel %vm481, %v480, 0.0
        %483 = vadd.xlane.f32.xlu0 %v482
        %v484 = vpop.xlane.xlu0 %483
        %v485 = vrcp.pop 32.0
        %v486 = vmul.f32 %v484, %v485
        %v487 = vsub.f32 %v480, %v486
        %v488 = vmul.f32 %v487, %v487
        %v489 = vsel %vm481, %v488, 0.0
        %490 = vadd.xlane.f32.xlu0 %v489
        %v491 = vpop.xlane.xlu0 %490
        %v492 = vmul.f32 %v491, %v485
        %v493 = vadd.f32 %v492, 1e-05
        %v494 = vrsqrt.pop %v493
        %v495 = vmul.f32 %v487, %v494
        %v496 = vld [vmem:[%s2] sm:$0x1]
        %v498 = vlaneseq
        %v499 = vshrl.u32 %v498, 7
        %v500 = vsub.s32 0, %v499
        %v501 = vrot.slane %v496, %v500
        %v503 = vmul.f32 %v495, %v501
        %v504 = vld [vmem:[#allocation6] sm:$0x1]
        %v506 = vlaneseq
        %v507 = vshrl.u32 %v506, 7
        %v508 = vsub.s32 0, %v507
        %v509 = vrot.slane %v504, %v508
        %v511 = vadd.f32 %v503, %v509
        %v512 = vpack.c.bf16 %v511, %v511
        %v513 = vld [vmem:[%s4] sm:$0xf]
        %v514 = vld [vmem:[%s4 + $0x4] sm:$0xf]
        %v515 = vld [vmem:[%s4 + $0x8] sm:$0xf]
        %v516 = vld [vmem:[%s4 + $0xc] sm:$0xf]
        %v517 = vld [vmem:[#allocation7] sm:$0x1]
        %v519 = vlaneseq
        %v520 = vshrl.u32 %v519, 7
        %v521 = vsub.s32 0, %v520
        %v522 = vrot.slane %v517, %v521
        %v528 = vunpack.c.l.b16 %v513
        %v529 = vunpack.c.l.b16 %v514
        %v530 = vunpack.c.l.b16 %v515
        %v531 = vunpack.c.l.b16 %v516
        %v532 = vpack.c.b16 %v529, %v528
        %v533 = vpack.c.b16 %v531, %v530
        %v537 = vsel %vm481, %v512, 0
        %539 = vmatprep.subr.bf16.mxu0 0
        %540 = vmatpush1.bf16.msra.mxu0 %v532
        %541 = vmatprep.subr.bf16.mxu0 0
        %542 = vmatpush1.bf16.msra.mxu0 %v533
        %543 = vmatprep.subr.bf16.mxu0 0
        %544 = vmatpush1.bf16.msra.mxu0 0
        %545 = vmatprep.subr.bf16.mxu0 0
        %546 = vmatpush1.bf16.msra.mxu0 0
        %547 = vmatprep.subr.bf16.mxu0 0
        %548 = vmatpush1.bf16.msra.mxu0 0
        %549 = vmatprep.subr.bf16.mxu0 0
        %550 = vmatpush1.bf16.msra.mxu0 0
        %551 = vmatprep.subr.bf16.mxu0 0
        %552 = vmatpush1.bf16.msra.mxu0 0
        %553 = vmatprep.subr.bf16.mxu0 0
        %554 = vmatpush1.bf16.msra.mxu0 0
        %555 = vmatprep.subr.bf16.mxu0 0
        %556 = vmatpush1.bf16.msra.mxu0 0
        %557 = vmatprep.subr.bf16.mxu0 0
        %558 = vmatpush1.bf16.msra.mxu0 0
        %559 = vmatprep.subr.bf16.mxu0 0
        %560 = vmatpush1.bf16.msra.mxu0 0
        %561 = vmatprep.subr.bf16.mxu0 0
        %562 = vmatpush1.bf16.msra.mxu0 0
        %563 = vmatprep.subr.bf16.mxu0 0
        %564 = vmatpush1.bf16.msra.mxu0 0
        %565 = vmatprep.subr.bf16.mxu0 0
        %566 = vmatpush1.bf16.msra.mxu0 0
        %567 = vmatprep.subr.bf16.mxu0 0
        %568 = vmatpush1.bf16.msra.mxu0 0
        %569 = vmatprep.subr.bf16.mxu0 0
        %570 = vmatpush1.bf16.msra.mxu0 0
        %571 = vmatprep.mubr.bf16.mxu0 0
        %572 = vmatmul.mubr.bf16.gmra.mrb[0].mxu0 %v537
        %v573 = vpop.f32.mrb[0].mxu0
        %v574 = vadd.f32 %v522, %v573
        %v575 = vpop.f32.mrb[0].mxu0
        %v576 = vpop.f32.mrb[0].mxu0
        %v577 = vpop.f32.mrb[0].mxu0
        %578 = vdwg.mxu0
        %v579 = vmax.f32 %v574, 0.0
        %v580 = vmul.f32 %v579, %v579
        %vm581 = vcmask 121856
        %v582 = vsel %vm581, %v580, 0.0
        %583 = vadd.xlane.f32.xlu0 %v582
        %v584 = vpop.xlane.xlu0 %583
        %v585 = vrsqrt.pop %v584
        %v586 = vmul.f32 %v584, %v585
        %vm587 = vcmp.eq.f32.partialorder %v584, inf
        %v588 = vsel %vm587, %v584, %v586
        %vm589 = vcmp.eq.f32.partialorder %v584, 0.0
        %v590 = vand.u32 %v584, 2147483648
        %v591 = vsel %vm589, %v590, %v588
        %v592 = vmul.f32 %v591, 1.442695
        %v593 = vpow.pop %v592
        %v594 = vsub.f32 0.0, %v591
        %v595 = vmul.f32 %v594, 1.442695
        %v596 = vpow.pop %v595
        %v597 = vadd.f32 %v593, %v596
        %v598 = vmul.f32 %v597, 0.5
        %vm599 = vcmp.lt.f32.partialorder %v591, 1e-06
        %v600 = vsub.f32 %v593, %v596
        %v601 = vmul.f32 %v600, 0.5
        %v602 = vmax.f32 %v591, 1e-30
        %v603 = vrcp.pop %v602
        %v604 = vmul.f32 %v601, %v603
        %v605 = vsel %vm599, 1.0, %v604
        %v606 = vmul.f32 %v605, %v579
        %v607 = vpack.c.bf16 %v606, %v606
        %v608 = vld [vmem:[%s7] sm:$0xf]
        %v609 = vld [vmem:[%s7 + $0x4] sm:$0xf]
        %v610 = vld [vmem:[%s6] sm:$0x1]
        %v612 = vlaneseq
        %v613 = vshrl.u32 %v612, 7
        %v614 = vsub.s32 0, %v613
        %v615 = vrot.slane %v610, %v614
        %v617 = vmul.f32 %v598, %v615
        %v620 = vunpack.c.l.b16 %v608
        %v621 = vunpack.c.l.b16 %v609
        %v622 = vpack.c.b16 %v621, %v620
        %v624 = vsel %vm581, %v607, 0
        %vm626 = vcmask 1046528
        %vm627 = vcmask 1047552
        %v628 = vsel %vm626, 4294967295, 65535
        %v629 = vsel %vm627, %v628, 0
        %v631 = vand.u32 %v622, %v629
        %633 = vmatprep.subr.bf16.mxu0 0
        %634 = vmatpush1.bf16.msra.mxu0 %v631
        %635 = vmatprep.subr.bf16.mxu0 0
        %636 = vmatpush1.bf16.msra.mxu0 0
        %637 = vmatprep.subr.bf16.mxu0 0
        %638 = vmatpush1.bf16.msra.mxu0 0
        %639 = vmatprep.subr.bf16.mxu0 0
        %640 = vmatpush1.bf16.msra.mxu0 0
        %641 = vmatprep.subr.bf16.mxu0 0
        %642 = vmatpush1.bf16.msra.mxu0 0
        %643 = vmatprep.subr.bf16.mxu0 0
        %644 = vmatpush1.bf16.msra.mxu0 0
        %645 = vmatprep.subr.bf16.mxu0 0
        %646 = vmatpush1.bf16.msra.mxu0 0
        %647 = vmatprep.subr.bf16.mxu0 0
        %648 = vmatpush1.bf16.msra.mxu0 0
        %649 = vmatprep.subr.bf16.mxu0 0
        %650 = vmatpush1.bf16.msra.mxu0 0
        %651 = vmatprep.subr.bf16.mxu0 0
        %652 = vmatpush1.bf16.msra.mxu0 0
        %653 = vmatprep.subr.bf16.mxu0 0
        %654 = vmatpush1.bf16.msra.mxu0 0
        %655 = vmatprep.subr.bf16.mxu0 0
        %656 = vmatpush1.bf16.msra.mxu0 0
        %657 = vmatprep.subr.bf16.mxu0 0
        %658 = vmatpush1.bf16.msra.mxu0 0
        %659 = vmatprep.subr.bf16.mxu0 0
        %660 = vmatpush1.bf16.msra.mxu0 0
        %661 = vmatprep.subr.bf16.mxu0 0
        %662 = vmatpush1.bf16.msra.mxu0 0
        %663 = vmatprep.subr.bf16.mxu0 0
        %664 = vmatpush1.bf16.msra.mxu0 0
        %665 = vmatprep.mubr.bf16.mxu0 0
        %666 = vmatmul.mubr.bf16.gmra.mrb[0].mxu0 %v624
        %v667 = vpop.f32.mrb[0].mxu0
        %v668 = vadd.f32 %v617, %v667
        %v669 = vpop.f32.mrb[0].mxu0
        %v670 = vpop.f32.mrb[0].mxu0
        %v671 = vpop.f32.mrb[0].mxu0
        %672 = vdwg.mxu0
        %v673 = vld [vmem:[%s8] sm:$0x1]
        %v675 = vlaneseq
        %v676 = vshrl.u32 %v675, 7
        %v677 = vsub.s32 0, %v676
        %v678 = vrot.slane %v673, %v677
        %v680 = vadd.f32 %v668, %v678
        %v681 = vlaneseq
        %v682 = vand.u32 %v681, 127
        %vm683 = vcmp.eq.s32.totalorder %v682, 0
        %v684 = vsel %vm683, 1, 0
        %vm685 = vcmp.eq.s32.totalorder %v684, 1
        %v686 = vsel %vm685, %v680, 0.0
        %vm687 = vcmask 130048
        %v688 = vsel %vm687, %v686, 0.0
        %689 = vadd.xlane.f32.xlu0 %v688
        %v690 = vpop.xlane.xlu0 %689
        %v691 = vsub.f32 0.0, %v690
        %v692 = vmul.f32 %v691, 1.442695
        %v693 = vpow.pop %v692
        %v694 = vadd.f32 %v693, 1.0
        %v695 = vrcp.pop %v694
        %v696 = vmul.f32 1.0, %v695
        %v697 = vstv %s478
        %v698 = vmul.f32 %v696, %v697
        %v699 = vadd.f32 %v698, 1.1
        %v700 = vmul.f32 %v680, %v680
        %v701 = vsel %vm685, 0.0, %v700
        %v702 = vsel %vm687, %v701, 0.0
        %703 = vadd.xlane.f32.xlu0 %v702
        %v704 = vpop.xlane.xlu0 %703
        %v705 = vmul.f32 %v699, %v699
        %v706 = vsub.f32 %v705, 1.0
        %v707 = vmax.f32 %v704, 1e-08
        %v708 = vrcp.pop %v707
        %v709 = vmul.f32 %v706, %v708
        %v710 = vrsqrt.pop %v709
        %v711 = vmul.f32 %v709, %v710
        %vm712 = vcmp.eq.f32.partialorder %v709, inf
        %v713 = vsel %vm712, %v709, %v711
        %vm714 = vcmp.eq.f32.partialorder %v709, 0.0
        %v715 = vand.u32 %v709, 2147483648
        %v716 = vsel %vm714, %v715, %v713
        %v717 = vmul.f32 %v680, %v716
        %v718 = vsel %vm685, %v699, %v717
        %720 = vrot.lane.b32.xlu0 %v680, 112
        %v721 = vpop.permute.xlu0 %720
        %v723 = vsel %vm685, %v721, 0.0
        %v724 = vsel %vm687, %v723, 0.0
        %725 = vadd.xlane.f32.xlu0 %v724
        %v726 = vpop.xlane.xlu0 %725
        %v727 = vsub.f32 0.0, %v726
        %v728 = vmul.f32 %v727, 1.442695
        %v729 = vpow.pop %v728
        %v730 = vadd.f32 %v729, 1.0
        %v731 = vrcp.pop %v730
        %v732 = vmul.f32 1.0, %v731
        %v733 = vmul.f32 %v732, %v697
        %v734 = vadd.f32 %v733, 1.1
        %736 = vrot.lane.b32.xlu0 %v700, 112
        %v737 = vpop.permute.xlu0 %736
        %v739 = vsel %vm685, 0.0, %v737
        %v740 = vsel %vm687, %v739, 0.0
        %741 = vadd.xlane.f32.xlu0 %v740
        %v742 = vpop.xlane.xlu0 %741
        %v743 = vmul.f32 %v734, %v734
        %v744 = vsub.f32 %v743, 1.0
        %v745 = vmax.f32 %v742, 1e-08
        %v746 = vrcp.pop %v745
        %v747 = vmul.f32 %v744, %v746
        %v748 = vrsqrt.pop %v747
        %v749 = vmul.f32 %v747, %v748
        %vm750 = vcmp.eq.f32.partialorder %v747, inf
        %v751 = vsel %vm750, %v747, %v749
        %vm752 = vcmp.eq.f32.partialorder %v747, 0.0
        %v753 = vand.u32 %v747, 2147483648
        %v754 = vsel %vm752, %v753, %v751
        %v755 = vmul.f32 %v680, %v754
        %757 = vrot.lane.b32.xlu0 %v755, 112
        %v758 = vpop.permute.xlu0 %757
        %v760 = vsel %vm685, %v734, %v758
        %761 = vrot.lane.b32.xlu0 %v680, 96
        %v762 = vpop.permute.xlu0 %761
        %v764 = vsel %vm685, %v762, 0.0
        %v765 = vsel %vm687, %v764, 0.0
        %766 = vadd.xlane.f32.xlu0 %v765
        %v767 = vpop.xlane.xlu0 %766
        %v768 = vsub.f32 0.0, %v767
        %v769 = vmul.f32 %v768, 1.442695
        %v770 = vpow.pop %v769
        %v771 = vadd.f32 %v770, 1.0
        %v772 = vrcp.pop %v771
        %v773 = vmul.f32 1.0, %v772
        %v774 = vmul.f32 %v773, %v697
        %v775 = vadd.f32 %v774, 1.1
        %776 = vrot.lane.b32.xlu0 %v700, 96
        %v777 = vpop.permute.xlu0 %776
        %v779 = vsel %vm685, 0.0, %v777
        %v780 = vsel %vm687, %v779, 0.0
        %781 = vadd.xlane.f32.xlu0 %v780
        %v782 = vpop.xlane.xlu0 %781
        %v783 = vmul.f32 %v775, %v775
        %v784 = vsub.f32 %v783, 1.0
        %v785 = vmax.f32 %v782, 1e-08
        %v786 = vrcp.pop %v785
        %v787 = vmul.f32 %v784, %v786
        %v788 = vrsqrt.pop %v787
        %v789 = vmul.f32 %v787, %v788
        %vm790 = vcmp.eq.f32.partialorder %v787, inf
        %v791 = vsel %vm790, %v787, %v789
        %vm792 = vcmp.eq.f32.partialorder %v787, 0.0
        %v793 = vand.u32 %v787, 2147483648
        %v794 = vsel %vm792, %v793, %v791
        %v795 = vmul.f32 %v680, %v794
        %797 = vrot.lane.b32.xlu0 %v795, 96
        %v798 = vpop.permute.xlu0 %797
        %v800 = vsel %vm685, %v775, %v798
        %vm801 = vcmp.eq.s32.totalorder %v682, 4
        %vm802 = vmor %vm683, %vm801
        %vm803 = vcmp.eq.s32.totalorder %v682, 8
        %vm804 = vmor %vm802, %vm803
        %vm805 = vcmp.eq.s32.totalorder %v682, 12
        %vm806 = vmor %vm804, %vm805
        %v807 = vsel %vm806, -1.0, 1.0
        %vm808 = vcmp.ge.s32.totalorder %v682, 0
        %vm809 = vcmp.lt.s32.totalorder %v682, 4
        %vm810 = vmand %vm808, %vm809
        %v811 = vsel %vm810, 1, 0
        %v812 = vcvt.s32.f32 %v811
        %vm813 = vcmp.ge.s32.totalorder %v682, 4
        %vm814 = vcmp.lt.s32.totalorder %v682, 8
        %vm815 = vmand %vm813, %vm814
        %v816 = vsel %vm815, 1, 0
        %v817 = vcvt.s32.f32 %v816
        %vm818 = vcmp.ge.s32.totalorder %v682, 8
        %vm819 = vcmp.lt.s32.totalorder %v682, 12
        %vm820 = vmand %vm818, %vm819
        %v821 = vsel %vm820, 1, 0
        %v822 = vcvt.s32.f32 %v821
        %vm823 = vcmp.ge.s32.totalorder %v682, 12
        %vm824 = vcmp.lt.s32.totalorder %v682, 16
        %vm825 = vmand %vm823, %vm824
        %v826 = vsel %vm825, 1, 0
        %v827 = vcvt.s32.f32 %v826
        %v828 = vmul.f32 %v718, %v807
        %v829 = vmul.f32 %v828, %v812
        %v830 = vmul.f32 %v828, %v817
        %v831 = vmul.f32 %v828, %v822
        %v832 = vmul.f32 %v828, %v827
        %v834 = vsel %vm687, %v829, 0
        %v837 = vsel %vm687, %v830, 0
        %v840 = vsel %vm687, %v831, 0
        %v843 = vsel %vm687, %v832, 0
        %v846 = vsel %vm687, %v760, 0
        %848 = vmatprep.subr.mxu0 0.0
        %849 = vmatpush1.xpose.msra.mxu0 %v846
        %850 = vmatprep.subr.mxu0 0.0
        %851 = vmatpush1.xpose.msra.mxu0 0.0
        %852 = vmatprep.subr.mxu0 0.0
        %853 = vmatpush1.xpose.msra.mxu0 0.0
        %854 = vmatprep.subr.mxu0 0.0
        %855 = vmatpush1.xpose.msra.mxu0 0.0
        %856 = vmatprep.subr.mxu0 0.0
        %857 = vmatpush1.xpose.msra.mxu0 0.0
        %858 = vmatprep.subr.mxu0 0.0
        %859 = vmatpush1.xpose.msra.mxu0 0.0
        %860 = vmatprep.subr.mxu0 0.0
        %861 = vmatpush1.xpose.msra.mxu0 0.0
        %862 = vmatprep.subr.mxu0 0.0
        %863 = vmatpush1.xpose.msra.mxu0 0.0
        %864 = vmatprep.subr.mxu0 0.0
        %865 = vmatpush1.xpose.msra.mxu0 0.0
        %866 = vmatprep.subr.mxu0 0.0
        %867 = vmatpush1.xpose.msra.mxu0 0.0
        %868 = vmatprep.subr.mxu0 0.0
        %869 = vmatpush1.xpose.msra.mxu0 0.0
        %870 = vmatprep.subr.mxu0 0.0
        %871 = vmatpush1.xpose.msra.mxu0 0.0
        %872 = vmatprep.subr.mxu0 0.0
        %873 = vmatpush1.xpose.msra.mxu0 0.0
        %874 = vmatprep.subr.mxu0 0.0
        %875 = vmatpush1.xpose.msra.mxu0 0.0
        %876 = vmatprep.subr.mxu0 0.0
        %877 = vmatpush1.xpose.msra.mxu0 0.0
        %878 = vmatprep.subr.mxu0 0.0
        %879 = vmatpush1.xpose.msra.mxu0 0.0
        %880 = vmatprep.subr.mxu0 0.0
        %881 = vmatpush1.xpose.msra.mxu0 0.0
        %882 = vmatprep.subr.mxu0 0.0
        %883 = vmatpush1.xpose.msra.mxu0 0.0
        %884 = vmatprep.subr.mxu0 0.0
        %885 = vmatpush1.xpose.msra.mxu0 0.0
        %886 = vmatprep.subr.mxu0 0.0
        %887 = vmatpush1.xpose.msra.mxu0 0.0
        %888 = vmatprep.subr.mxu0 0.0
        %889 = vmatpush1.xpose.msra.mxu0 0.0
        %890 = vmatprep.subr.mxu0 0.0
        %891 = vmatpush1.xpose.msra.mxu0 0.0
        %892 = vmatprep.subr.mxu0 0.0
        %893 = vmatpush1.xpose.msra.mxu0 0.0
        %894 = vmatprep.subr.mxu0 0.0
        %895 = vmatpush1.xpose.msra.mxu0 0.0
        %896 = vmatprep.subr.mxu0 0.0
        %897 = vmatpush1.xpose.msra.mxu0 0.0
        %898 = vmatprep.subr.mxu0 0.0
        %899 = vmatpush1.xpose.msra.mxu0 0.0
        %900 = vmatprep.subr.mxu0 0.0
        %901 = vmatpush1.xpose.msra.mxu0 0.0
        %902 = vmatprep.subr.mxu0 0.0
        %903 = vmatpush1.xpose.msra.mxu0 0.0
        %904 = vmatprep.subr.mxu0 0.0
        %905 = vmatpush1.xpose.msra.mxu0 0.0
        %906 = vmatprep.subr.mxu0 0.0
        %907 = vmatpush1.xpose.msra.mxu0 0.0
        %908 = vmatprep.subr.mxu0 0.0
        %909 = vmatpush1.xpose.msra.mxu0 0.0
        %910 = vmatprep.subr.mxu0 0.0
        %911 = vmatpush1.xpose.msra.mxu0 0.0
        %912 = vmatprep.mubr.f32.mxu0 0.0
        %913 = vmatmul.mubr.f32.gmra.mrb[0].mxu0 %v834
        %v914 = vpop.f32.mrb[0].mxu0
        %v915 = vadd.f32 0.0, %v914
        %v916 = vpop.f32.mrb[0].mxu0
        %917 = vmatprep.mubr.f32.mxu0 0.0
        %918 = vmatmul.mubr.f32.gmra.mrb[0].mxu0 %v837
        %v919 = vpop.f32.mrb[0].mxu0
        %v920 = vadd.f32 0.0, %v919
        %v921 = vpop.f32.mrb[0].mxu0
        %922 = vmatprep.mubr.f32.mxu0 0.0
        %923 = vmatmul.mubr.f32.gmra.mrb[0].mxu0 %v840
        %v924 = vpop.f32.mrb[0].mxu0
        %v925 = vadd.f32 0.0, %v924
        %v926 = vpop.f32.mrb[0].mxu0
        %927 = vmatprep.mubr.f32.mxu0 0.0
        %928 = vmatmul.mubr.f32.gmra.mrb[0].mxu0 %v843
        %v929 = vpop.f32.mrb[0].mxu0
        %v930 = vadd.f32 0.0, %v929
        %v931 = vpop.f32.mrb[0].mxu0
        %932 = vdwg.mxu0
        %vm933 = vcmask 64512
        %v934 = vsel %vm933, %v915, -inf
        %935 = vmax.xlane.f32.xlu0 %v934
        %v936 = vpop.xlane.xlu0 %935
        %v937 = vsel %vm933, %v920, -inf
        %938 = vmax.xlane.f32.xlu0 %v937
        %v939 = vpop.xlane.xlu0 %938
        %v940 = vsel %vm933, %v925, -inf
        %941 = vmax.xlane.f32.xlu0 %v940
        %v942 = vpop.xlane.xlu0 %941
        %v943 = vsel %vm933, %v930, -inf
        %944 = vmax.xlane.f32.xlu0 %v943
        %v945 = vpop.xlane.xlu0 %944
        %v946 = vsub.f32 %v915, %v936
        %v947 = vsub.f32 %v920, %v939
        %v948 = vsub.f32 %v925, %v942
        %v949 = vsub.f32 %v930, %v945
        %v950 = vstv %s479
        %v951 = vmul.f32 %v946, %v950
        %v952 = vmul.f32 %v947, %v950
        %v953 = vmul.f32 %v948, %v950
        %v954 = vmul.f32 %v949, %v950
        %v955 = vmul.f32 %v951, 1.442695
        %v956 = vpow.pop %v955
        %v957 = vmul.f32 %v952, 1.442695
        %v958 = vpow.pop %v957
        %v959 = vmul.f32 %v953, 1.442695
        %v960 = vpow.pop %v959
        %v961 = vmul.f32 %v954, 1.442695
        %v962 = vpow.pop %v961
        %v963 = vpack.c.bf16 %v958, %v956
        %v964 = vpack.c.bf16 %v962, %v960
        %v965 = vpack.c.bf16 %v800, %v800
        %v967 = vsel %vm933, %v963, 0
        %v970 = vsel %vm933, %v964, 0
        %vm972 = vcmask 1043456
        %v974 = vsel %vm972, %v965, 0
        %976 = vmatprep.subr.bf16.mxu0 0
        %977 = vmatpush1.bf16.msra.mxu0 %v974
        %978 = vmatprep.subr.bf16.mxu0 0
        %979 = vmatpush1.bf16.msra.mxu0 0
        %980 = vmatprep.subr.bf16.mxu0 0
        %981 = vmatpush1.bf16.msra.mxu0 0
        %982 = vmatprep.subr.bf16.mxu0 0
        %983 = vmatpush1.bf16.msra.mxu0 0
        %984 = vmatprep.subr.bf16.mxu0 0
        %985 = vmatpush1.bf16.msra.mxu0 0
        %986 = vmatprep.subr.bf16.mxu0 0
        %987 = vmatpush1.bf16.msra.mxu0 0
        %988 = vmatprep.subr.bf16.mxu0 0
        %989 = vmatpush1.bf16.msra.mxu0 0
        %990 = vmatprep.subr.bf16.mxu0 0
        %991 = vmatpush1.bf16.msra.mxu0 0
        %992 = vmatprep.subr.bf16.mxu0 0
        %993 = vmatpush1.bf16.msra.mxu0 0
        %994 = vmatprep.subr.bf16.mxu0 0
        %995 = vmatpush1.bf16.msra.mxu0 0
        %996 = vmatprep.subr.bf16.mxu0 0
        %997 = vmatpush1.bf16.msra.mxu0 0
        %998 = vmatprep.subr.bf16.mxu0 0
        %999 = vmatpush1.bf16.msra.mxu0 0
        %1000 = vmatprep.subr.bf16.mxu0 0
        %1001 = vmatpush1.bf16.msra.mxu0 0
        %1002 = vmatprep.subr.bf16.mxu0 0
        %1003 = vmatpush1.bf16.msra.mxu0 0
        %1004 = vmatprep.subr.bf16.mxu0 0
        %1005 = vmatpush1.bf16.msra.mxu0 0
        %1006 = vmatprep.subr.bf16.mxu0 0
        %1007 = vmatpush1.bf16.msra.mxu0 0
        %1008 = vmatprep.mubr.bf16.mxu0 0
        %1009 = vmatmul.mubr.bf16.gmra.mrb[0].mxu0 %v967
        %v1010 = vpop.f32.mrb[0].mxu0
        %v1011 = vadd.f32 0.0, %v1010
        %v1012 = vpop.f32.mrb[0].mxu0
        %v1013 = vpop.f32.mrb[0].mxu0
        %v1014 = vadd.f32 0.0, %v1013
        %v1015 = vpop.f32.mrb[0].mxu0
        %1016 = vmatprep.mubr.bf16.mxu0 0
        %1017 = vmatmul.mubr.bf16.gmra.mrb[0].mxu0 %v970
        %v1018 = vpop.f32.mrb[0].mxu0
        %v1019 = vadd.f32 0.0, %v1018
        %v1020 = vpop.f32.mrb[0].mxu0
        %v1021 = vpop.f32.mrb[0].mxu0
        %v1022 = vadd.f32 0.0, %v1021
        %v1023 = vpop.f32.mrb[0].mxu0
        %1024 = vdwg.mxu0
        %v1025 = vmul.f32 %v1011, %v812
        %v1026 = vmul.f32 %v1014, %v817
        %v1027 = vmul.f32 %v1019, %v822
        %v1028 = vmul.f32 %v1022, %v827
        %v1029 = vmul.f32 %v1025, %v1025
        %v1030 = vmul.f32 %v1026, %v1026
        %v1031 = vmul.f32 %v1027, %v1027
        %v1032 = vmul.f32 %v1028, %v1028
        %v1033 = vmul.f32 %v1029, %v807
        %v1034 = vmul.f32 %v1030, %v807
        %v1035 = vmul.f32 %v1031, %v807
        %v1036 = vmul.f32 %v1032, %v807
        %v1037 = vsel %vm687, %v1033, 0.0
        %1038 = vadd.xlane.f32.xlu0 %v1037
        %v1039 = vpop.xlane.xlu0 %1038
        %v1040 = vsel %vm687, %v1034, 0.0
        %1041 = vadd.xlane.f32.xlu0 %v1040
        %v1042 = vpop.xlane.xlu0 %1041
        %v1043 = vsel %vm687, %v1035, 0.0
        %1044 = vadd.xlane.f32.xlu0 %v1043
        %v1045 = vpop.xlane.xlu0 %1044
        %v1046 = vsel %vm687, %v1036, 0.0
        %1047 = vadd.xlane.f32.xlu0 %v1046
        %v1048 = vpop.xlane.xlu0 %1047
        %v1049 = vand.u32 2147483647, %v1039
        %v1050 = vand.u32 2147483647, %v1042
        %v1051 = vand.u32 2147483647, %v1045
        %v1052 = vand.u32 2147483647, %v1048
        %v1053 = vmax.f32 %v1049, 1e-08
        %v1054 = vmax.f32 %v1050, 1e-08
        %v1055 = vmax.f32 %v1051, 1e-08
        %v1056 = vmax.f32 %v1052, 1e-08
        %v1057 = vrsqrt.pop %v1053
        %v1058 = vrsqrt.pop %v1054
        %v1059 = vrsqrt.pop %v1055
        %v1060 = vrsqrt.pop %v1056
        %v1061 = vmul.f32 %v1025, %v1057
        %v1062 = vmul.f32 %v1026, %v1058
        %v1063 = vmul.f32 %v1027, %v1059
        %v1064 = vmul.f32 %v1028, %v1060
        %v1065 = vadd.f32 %v1061, %v1062
        %v1066 = vadd.f32 %v1065, %v1063
        %v1067 = vadd.f32 %v1066, %v1064
        %v1068 = vsel %vm685, %v1067, 0.0
        %v1069 = vsel %vm687, %v1068, 0.0
        %1070 = vadd.xlane.f32.xlu0 %v1069
        %v1071 = vpop.xlane.xlu0 %1070
        %v1072 = vmax.f32 %v1071, 1.0000001
        %v1073 = vmul.f32 %v1072, %v1072
        %v1074 = vsub.f32 %v1073, 1.0
        %v1075 = vrsqrt.pop %v1074
        %v1076 = vmul.f32 %v1074, %v1075
        %vm1077 = vcmp.eq.f32.partialorder %v1074, inf
        %v1078 = vsel %vm1077, %v1074, %v1076
        %vm1079 = vcmp.eq.f32.partialorder %v1074, 0.0
        %v1080 = vand.u32 %v1074, 2147483648
        %v1081 = vsel %vm1079, %v1080, %v1078
        %v1082 = vadd.f32 %v1072, %v1081
        %v1083 = vlog2.pop %v1082
        %v1084 = vmul.f32 %v1083, 0.6931472
        %v1085 = vmax.f32 %v1081, 1e-07
        %v1086 = vrcp.pop %v1085
        %v1087 = vmul.f32 %v1084, %v1086
        %v1088 = vstv %s477
        %v1089 = vmul.f32 %v1087, %v1088
        %v1090 = vmul.f32 %v1067, %v1089
        %v1091 = vsel %vm685, 0.0, %v1090
        %v1092 = vsel %vm687, %v1091, 0.0
        %1093 = vadd.xlane.f32.xlu0 %v1092
        %v1094 = vpop.xlane.xlu0 %1093
        %v1095 = vrcp.pop 15.0
        %v1096 = vmul.f32 %v1094, %v1095
        %v1097 = vsub.f32 %v1090, %v1096
        %v1098 = vsel %vm685, 0.0, %v1097
        %v1099 = vmul.f32 %v1098, %v1098
        %v1100 = vsel %vm687, %v1099, 0.0
        %1101 = vadd.xlane.f32.xlu0 %v1100
        %v1102 = vpop.xlane.xlu0 %1101
        %v1103 = vmul.f32 %v1102, %v1095
        %v1104 = vadd.f32 %v1103, 1e-05
        %v1105 = vrsqrt.pop %v1104
        %v1106 = vmul.f32 %v1098, %v1105
        %v1107 = vld [vmem:[%s9] sm:$0x1]
        %v1109 = vlaneseq
        %v1110 = vshrl.u32 %v1109, 7
        %v1111 = vsub.s32 0, %v1110
        %v1112 = vrot.slane %v1107, %v1111
        %v1114 = vmul.f32 %v1106, %v1112
        %v1115 = vld [vmem:[%s10] sm:$0x1]
        %v1117 = vlaneseq
        %v1118 = vshrl.u32 %v1117, 7
        %v1119 = vsub.s32 0, %v1118
        %v1120 = vrot.slane %v1115, %v1119
        %v1122 = vadd.f32 %v1114, %v1120
        %v1123 = vpack.c.bf16 %v1122, %v1122
        %v1124 = vld [vmem:[%s11] sm:$0xf]
        %v1125 = vld [vmem:[%s11 + $0x4] sm:$0xf]
        %v1126 = vld [vmem:[%s12] sm:$0x1]
        %v1128 = vlaneseq
        %v1129 = vshrl.u32 %v1128, 7
        %v1130 = vsub.s32 0, %v1129
        %v1131 = vrot.slane %v1126, %v1130
        %v1135 = vunpack.c.l.b16 %v1124
        %v1136 = vunpack.c.l.b16 %v1125
        %v1137 = vpack.c.b16 %v1136, %v1135
        %v1140 = vsel %vm687, %v1123, 0
        %1142 = vmatprep.subr.bf16.mxu0 0
        %1143 = vmatpush1.bf16.msra.mxu0 %v1137
        %1144 = vmatprep.subr.bf16.mxu0 0
        %1145 = vmatpush1.bf16.msra.mxu0 0
        %1146 = vmatprep.subr.bf16.mxu0 0
        %1147 = vmatpush1.bf16.msra.mxu0 0
        %1148 = vmatprep.subr.bf16.mxu0 0
        %1149 = vmatpush1.bf16.msra.mxu0 0
        %1150 = vmatprep.subr.bf16.mxu0 0
        %1151 = vmatpush1.bf16.msra.mxu0 0
        %1152 = vmatprep.subr.bf16.mxu0 0
        %1153 = vmatpush1.bf16.msra.mxu0 0
        %1154 = vmatprep.subr.bf16.mxu0 0
        %1155 = vmatpush1.bf16.msra.mxu0 0
        %1156 = vmatprep.subr.bf16.mxu0 0
        %1157 = vmatpush1.bf16.msra.mxu0 0
        %1158 = vmatprep.subr.bf16.mxu0 0
        %1159 = vmatpush1.bf16.msra.mxu0 0
        %1160 = vmatprep.subr.bf16.mxu0 0
        %1161 = vmatpush1.bf16.msra.mxu0 0
        %1162 = vmatprep.subr.bf16.mxu0 0
        %1163 = vmatpush1.bf16.msra.mxu0 0
        %1164 = vmatprep.subr.bf16.mxu0 0
        %1165 = vmatpush1.bf16.msra.mxu0 0
        %1166 = vmatprep.subr.bf16.mxu0 0
        %1167 = vmatpush1.bf16.msra.mxu0 0
        %1168 = vmatprep.subr.bf16.mxu0 0
        %1169 = vmatpush1.bf16.msra.mxu0 0
        %1170 = vmatprep.subr.bf16.mxu0 0
        %1171 = vmatpush1.bf16.msra.mxu0 0
        %1172 = vmatprep.subr.bf16.mxu0 0
        %1173 = vmatpush1.bf16.msra.mxu0 0
        %1174 = vmatprep.mubr.bf16.mxu0 0
        %1175 = vmatmul.mubr.bf16.gmra.mrb[0].mxu0 %v1140
        %v1176 = vpop.f32.mrb[0].mxu0
        %v1177 = vadd.f32 %v1131, %v1176
        %v1178 = vpop.f32.mrb[0].mxu0
        %v1179 = vpop.f32.mrb[0].mxu0
        %v1180 = vpop.f32.mrb[0].mxu0
        %1181 = vdwg.mxu0
        %v1182 = vmax.f32 %v1177, 0.0
        %1183 = vst.msk [vmem:[%s471] sm:$0xff] %vm481, %v1182
        %s1184 = sand.u32 %s316, 1
        %s1185 = scalar_lea.sflag [#allocation4], %s1184
        %s1186 = sand.u32 %s316, 1
        %s1187 = smul.addr %s1186, 8
        %s1188 = scalar_lea.vmem [#allocation9], %s1187
        // Predicated region
        $region85: #{tpu_custom_call.1} parent=71 // pred_check
          %p1189 = pneg %p326
        $region86: #{tpu_custom_call.1} parent=71 // pred_check_branch
          %1191 = sbr.rel (%p1189) target = $region88
        $region87: #{tpu_custom_call.1} parent=71 // pred_region
          %s1193 = ssub.s32 128, 128
          %1194 = vsyncadd %s1185, %s1193
          %s1195 = smul.addr %s30, 128
          %s1196 = scalar_lea.hbm %s13, %s1195
          %s1198 = sshll.u32 %s1188, 4
          %s1199 = int_to_ptr.vmem [resolvable:$true] %s1198
          %1201 = dma.vmem_to_hbm [thread:$0]  %s1199, 128, %s1196, %s1185
        $region88: #{tpu_custom_call.1} parent=71 // pred_fallthru
          _
      $region72: #{tpu_custom_call.1} parent=5 // pred_fallthru
        _
      %p1202 = scmp.le.s32.totalorder 2, %s25
      // Predicated region
      $region89: #{tpu_custom_call.1} parent=5 // pred_check
        %p1203 = pneg %p1202
      $region90: #{tpu_custom_call.1} parent=5 // pred_check_branch
        %1205 = sbr.rel (%p1203) target = $region92
      $region91: #{tpu_custom_call.1} parent=5 // pred_region
        %s1206 = ssub.s32 %s25, 2
        // Predicated region
        $region93: #{tpu_custom_call.1} parent=91 // pred_check
          %p1207 = pneg %p332
        $region94: #{tpu_custom_call.1} parent=91 // pred_check_branch
          %1209 = sbr.rel (%p1207) target = $region96
        $region95: #{tpu_custom_call.1} parent=91 // pred_region
          %s1210 = sand.u32 %s317, 1
          %s1211 = scalar_lea.sflag [#allocation4], %s1210
          %s1212 = sand.u32 %s317, 1
          %s1213 = smul.addr %s1212, 8
          %s1214 = scalar_lea.vmem [#allocation9], %s1213
          %1215 = dma.done %s1211, 128
        $region96: #{tpu_custom_call.1} parent=91 // pred_fallthru
          _
      $region92: #{tpu_custom_call.1} parent=5 // pred_fallthru
        _
    $region6: #{tpu_custom_call.1} parent=1 // loop_footer
      %s29 = sadd.s32 1, %s25
    $region7: #{tpu_custom_call.1} parent=1 // loop_footer_branch
      %24 = sbr.rel target = $region3
    $region8: #{tpu_custom_call.1} parent=1 // loop_exit
      _
    %1216 = vsyncpa [#allocation3], 1
    %s1217 = scalar_lea.sflag [#allocation3], 1
    %1218 = vsyncpa %s1217, 1
    %1219 = vsyncpa [#allocation8], 1
    %1220 = vsyncpa [#allocation4], 1
    %s1221 = scalar_lea.sflag [#allocation4], 1
    %1222 = vsyncpa %s1221, 1
    %1223 = vsyncpa [#allocation5], 1
    %s1224 = scalar_lea.sflag [#allocation5], 1
    %1225 = vsyncpa %s1224, 1

</llo_original>
